<compile_context>
chip_gen: v7x
topology: tpu7x:2x2x1
jax: 0.10.0
libtpu: 0.0.40
codegen_flags: <defaults>
</compile_context>

<pallas_src>
import math
import functools

import jax
import jax.numpy as jnp
from jax import lax
from jax.experimental import pallas as pl
from jax.experimental.pallas import tpu as pltpu


def _attn_kernel(hs_ref, ctx_ref, mask_ref,
                 wq_ref, bq_ref, wk_ref, bk_ref, wv_ref, bv_ref,
                 *out_refs, num_heads, head_size, with_scores):
    out_ref = out_refs[0]
    scores_ref = out_refs[1] if with_scores else None

    tq = hs_ref.shape[1]
    sk = ctx_ref.shape[1]

    hs = hs_ref[0]          # (TQ, H)
    ctx = ctx_ref[0]        # (Sk, C)

    # Full-width projections (MXU N = all_head, lane-dense); weights already resident in VMEM.
    q = jnp.dot(hs, wq_ref[...], preferred_element_type=jnp.float32) + bq_ref[...]   # (TQ, AH)
    k = jnp.dot(ctx, wk_ref[...], preferred_element_type=jnp.float32) + bk_ref[...]  # (Sk, AH)
    v = jnp.dot(ctx, wv_ref[...], preferred_element_type=jnp.float32) + bv_ref[...]  # (Sk, AH)

    # Fold the 1/sqrt(dh) scale into q (TQ*AH elements instead of nH*TQ*Sk).
    q = q * (1.0 / math.sqrt(head_size))

    # Hoist the mask broadcast out of the head loop (JAX does not CSE broadcast_in_dim).
    mask_b = jnp.broadcast_to(mask_ref[0, 0], (tq, sk)).astype(jnp.float32)

    for h in range(num_heads):            # static unroll over heads
        sl = slice(h * head_size, (h + 1) * head_size)
        qh, kh, vh = q[:, sl], k[:, sl], v[:, sl]

        # QK^T: contract the head dim directly - no materialized k.T.
        s = lax.dot_general(qh, kh, (((1,), (1,)), ((), ())),
                            preferred_element_type=jnp.float32)   # (TQ, Sk)
        s = s + mask_b
        if with_scores:
            scores_ref[0, h] = s.astype(scores_ref.dtype)          # post-mask, pre-softmax

        # Softmax over keys.
        m = jnp.max(s, axis=-1, keepdims=True)
        e = jnp.exp(s - m)
        l = jnp.sum(e, axis=-1, keepdims=True)
        p = e * pl.reciprocal(l, approx=True)                      # EUP slot

        # Per-head store straight into the lane slice of the (TQ, all_head) output block
        # (already the permute(0,2,1,3).reshape layout -> one lane-dense HBM writeback).
        pv = jnp.dot(p, vh, preferred_element_type=jnp.float32)
        out_ref[0, :, sl] = pv.astype(out_ref.dtype)


def bert_out_attention(hidden_states, context, attention_mask, params,
                       *, num_heads, head_size, return_scores=True, q_tile=128):
    """Fused cross-attention.

    Returns (context_layer [B,Sq,all_head], scores [B,nH,Sq,Sk] or None)."""
    B, Sq, H = hidden_states.shape
    _, Sk, C = context.shape
    all_head = num_heads * head_size

    if attention_mask is None:
        attention_mask = jnp.zeros((B, 1, 1, Sk), dtype=jnp.float32)

    wq, wk, wv = params["wq"], params["wk"], params["wv"]
    bq = params["bq"].reshape(1, all_head)
    bk = params["bk"].reshape(1, all_head)
    bv = params["bv"].reshape(1, all_head)

    # Query-tile size: full Sq for small sequences, else 128 rows per grid step.
    tq = Sq if Sq <= q_tile else q_tile
    n_q_tiles = pl.cdiv(Sq, tq)

    # Mask may be (B,1,1,Sk) (standard BERT) or (B,1,Sq,Sk) (extended per-query mask).
    if attention_mask.shape[2] == 1:
        mask_spec = pl.BlockSpec((1, 1, 1, Sk), lambda b, qi: (b, 0, 0, 0))
    else:
        mask_spec = pl.BlockSpec((1, 1, tq, Sk), lambda b, qi: (b, 0, qi, 0))

    # Constant weights/biases: whole-array VMEM residents (single buffer, DMA'd once).
    resident = pl.BlockSpec(memory_space=pltpu.MemorySpace.VMEM)

    ctx_struct = jax.ShapeDtypeStruct((B, Sq, all_head), hidden_states.dtype)
    ctx_spec = pl.BlockSpec((1, tq, all_head), lambda b, qi: (b, qi, 0))

    if return_scores:
        out_shape = (ctx_struct,
                     jax.ShapeDtypeStruct((B, num_heads, Sq, Sk), jnp.float32))
        out_specs = (ctx_spec,
                     pl.BlockSpec((1, num_heads, tq, Sk), lambda b, qi: (b, 0, qi, 0)))
    else:
        out_shape = ctx_struct
        out_specs = ctx_spec

    kernel = functools.partial(_attn_kernel, num_heads=num_heads,
                               head_size=head_size, with_scores=return_scores)

    result = pl.pallas_call(
        kernel,
        out_shape=out_shape,
        grid_spec=pltpu.PrefetchScalarGridSpec(
            num_scalar_prefetch=0,
            grid=(B, n_q_tiles),
            in_specs=[
                pl.BlockSpec((1, tq, H), lambda b, qi: (b, qi, 0)),   # hidden_states
                pl.BlockSpec((1, Sk, C), lambda b, qi: (b, 0, 0)),    # context
                mask_spec,                                            # additive mask
                resident,  # Wq
                resident,  # bq
                resident,  # Wk
                resident,  # bk
                resident,  # Wv
                resident,  # bv
            ],
            out_specs=out_specs,
        ),
        compiler_params=pltpu.CompilerParams(
            dimension_semantics=("parallel", "parallel"),
            vmem_limit_bytes=48 * 1024 * 1024),
    )(hidden_states, context, attention_mask, wq, bq, wk, bk, wv, bv)

    if return_scores:
        context_layer, scores = result
        return context_layer, scores
    return result, None


def _reference(hidden_states, context, attention_mask, params, *, num_heads, head_size):
    B, Sq, H = hidden_states.shape
    _, Sk, C = context.shape
    q = hidden_states @ params["wq"] + params["bq"]
    k = context @ params["wk"] + params["bk"]
    v = context @ params["wv"] + params["bv"]

    def split(x, S):
        return x.reshape(B, S, num_heads, head_size).transpose(0, 2, 1, 3)

    qh, kh, vh = split(q, Sq), split(k, Sk), split(v, Sk)
    scores = jnp.einsum("bhqd,bhkd->bhqk", qh, kh) / math.sqrt(head_size)
    scores = scores + attention_mask
    probs = jax.nn.softmax(scores, axis=-1)
    ctx_l = jnp.einsum("bhqk,bhkd->bhqd", probs, vh)
    ctx_l = ctx_l.transpose(0, 2, 1, 3).reshape(B, Sq, num_heads * head_size)
    return ctx_l, scores


if __name__ == "__main__":
    # Small config consistent with the module: hidden=32, heads=4, head_size=8.
    B, Sq, Sk = 2, 8, 8
    hidden = 32
    num_heads = 4
    head_size = hidden // num_heads
    ctx_dim = hidden  # ctx_dim=None in the module -> hidden_size

    key = jax.random.PRNGKey(0)
    k_hs, k_ctx, k_mask, kwq, kwk, kwv, kbq, kbk, kbv = jax.random.split(key, 9)

    hidden_states = jax.random.normal(k_hs, (B, Sq, hidden), dtype=jnp.float32)
    context = jax.random.normal(k_ctx, (B, Sk, ctx_dim), dtype=jnp.float32)
    # BERT-style additive mask: 0 for keep, -10000 for masked positions.
    keep = (jax.random.uniform(k_mask, (B, 1, 1, Sk)) > 0.2).astype(jnp.float32)
    attention_mask = (1.0 - keep) * -10000.0

    scale = 0.02
    params = {
        "wq": scale * jax.random.normal(kwq, (hidden, hidden), dtype=jnp.float32),
        "wk": scale * jax.random.normal(kwk, (ctx_dim, hidden), dtype=jnp.float32),
        "wv": scale * jax.random.normal(kwv, (ctx_dim, hidden), dtype=jnp.float32),
        "bq": scale * jax.random.normal(kbq, (hidden,), dtype=jnp.float32),
        "bk": scale * jax.random.normal(kbk, (hidden,), dtype=jnp.float32),
        "bv": scale * jax.random.normal(kbv, (hidden,), dtype=jnp.float32),
    }

    ctx_layer, scores = bert_out_attention(
        hidden_states, context, attention_mask, params,
        num_heads=num_heads, head_size=head_size, return_scores=True)
    jax.block_until_ready((ctx_layer, scores))

    ref_ctx, ref_scores = _reference(
        hidden_states, context, attention_mask, params,
        num_heads=num_heads, head_size=head_size)

    # Context layer goes through the EUP approximate reciprocal -> slightly looser tolerance.
    assert jnp.allclose(ctx_layer, ref_ctx, atol=1e-3, rtol=1e-3)
    # Scores are pure f32 MXU accumulation -> tight tolerance.
    assert jnp.allclose(scores, ref_scores, atol=1e-4, rtol=1e-4)

    # Scores-free fast path (drops the dominant HBM writeback entirely).
    ctx_only, none_scores = bert_out_attention(
        hidden_states, context, attention_mask, params,
        num_heads=num_heads, head_size=head_size, return_scores=False)
    jax.block_until_ready(ctx_only)
    assert none_scores is None
    assert jnp.allclose(ctx_only, ref_ctx, atol=1e-3, rtol=1e-3)

    print("KERNEL_OK")
</pallas_src>

<mosaic_0001>
module attributes {stable_mosaic.version = 11 : i64} {
  func.func @_attn_kernel(%arg0: i32, %arg1: i32, %arg2: memref<1x8x32xf32, #tpu.memory_space<vmem>>, %arg3: memref<1x8x32xf32, #tpu.memory_space<vmem>>, %arg4: memref<1x1x1x8xf32, #tpu.memory_space<vmem>>, %arg5: memref<32x32xf32, #tpu.memory_space<vmem>>, %arg6: memref<1x32xf32, #tpu.memory_space<vmem>>, %arg7: memref<32x32xf32, #tpu.memory_space<vmem>>, %arg8: memref<1x32xf32, #tpu.memory_space<vmem>>, %arg9: memref<32x32xf32, #tpu.memory_space<vmem>>, %arg10: memref<1x32xf32, #tpu.memory_space<vmem>>, %arg11: memref<1x8x32xf32, #tpu.memory_space<vmem>>, %arg12: memref<1x4x8x8xf32, #tpu.memory_space<vmem>>) attributes {dimension_semantics = [#tpu.dimension_semantics<parallel>, #tpu.dimension_semantics<parallel>], iteration_bounds = array<i64: 2, 1>, scalar_prefetch = 0 : i64, scratch_operands = 0 : i64, tpu.core_type = #tpu.core_type<tc>, window_params = [{transform_indices = @transform_0, window_bounds = array<i64: 1, 8, 32>}, {transform_indices = @transform_1, window_bounds = array<i64: 1, 8, 32>}, {transform_indices = @transform_2, window_bounds = array<i64: 1, 1, 1, 8>}, {pipeline_mode = #tpu.pipeline_mode<synchronous>, transform_indices = @transform_3, window_bounds = array<i64: 32, 32>}, {pipeline_mode = #tpu.pipeline_mode<synchronous>, transform_indices = @transform_4, window_bounds = array<i64: 1, 32>}, {pipeline_mode = #tpu.pipeline_mode<synchronous>, transform_indices = @transform_5, window_bounds = array<i64: 32, 32>}, {pipeline_mode = #tpu.pipeline_mode<synchronous>, transform_indices = @transform_6, window_bounds = array<i64: 1, 32>}, {pipeline_mode = #tpu.pipeline_mode<synchronous>, transform_indices = @transform_7, window_bounds = array<i64: 32, 32>}, {pipeline_mode = #tpu.pipeline_mode<synchronous>, transform_indices = @transform_8, window_bounds = array<i64: 1, 32>}, {transform_indices = @transform_9, window_bounds = array<i64: 1, 8, 32>}, {transform_indices = @transform_10, window_bounds = array<i64: 1, 4, 8, 8>}]} {
    %c0 = arith.constant 0 : index
    %c0_0 = arith.constant 0 : index
    %c0_1 = arith.constant 0 : index
    %0 = vector.load %arg2[%c0, %c0_0, %c0_1] : memref<1x8x32xf32, #tpu.memory_space<vmem>>, vector<1x8x32xf32>
    %1 = vector.shape_cast %0 : vector<1x8x32xf32> to vector<8x32xf32>
    %c0_2 = arith.constant 0 : index
    %c0_3 = arith.constant 0 : index
    %c0_4 = arith.constant 0 : index
    %2 = vector.load %arg3[%c0_2, %c0_3, %c0_4] : memref<1x8x32xf32, #tpu.memory_space<vmem>>, vector<1x8x32xf32>
    %3 = vector.shape_cast %2 : vector<1x8x32xf32> to vector<8x32xf32>
    %c0_5 = arith.constant 0 : index
    %c0_6 = arith.constant 0 : index
    %4 = vector.load %arg5[%c0_5, %c0_6] : memref<32x32xf32, #tpu.memory_space<vmem>>, vector<32x32xf32>
    %cst = arith.constant dense<0.000000e+00> : vector<8x32xf32>
    %5 = tpu.matmul %1, %4, %cst {dimension_numbers = #tpu.dot_dimension_numbers<[1], [0], [0], [1], [0, 0, 1, 1], [], []>} : vector<8x32xf32>, vector<32x32xf32>, vector<8x32xf32> -> vector<8x32xf32>
    %c0_7 = arith.constant 0 : index
    %c0_8 = arith.constant 0 : index
    %6 = vector.load %arg6[%c0_7, %c0_8] : memref<1x32xf32, #tpu.memory_space<vmem>>, vector<1x32xf32>
    %7 = vector.broadcast %6 : vector<1x32xf32> to vector<8x32xf32>
    %8 = arith.addf %5, %7 : vector<8x32xf32>
    %c0_9 = arith.constant 0 : index
    %c0_10 = arith.constant 0 : index
    %9 = vector.load %arg7[%c0_9, %c0_10] : memref<32x32xf32, #tpu.memory_space<vmem>>, vector<32x32xf32>
    %cst_11 = arith.constant dense<0.000000e+00> : vector<8x32xf32>
    %10 = tpu.matmul %3, %9, %cst_11 {dimension_numbers = #tpu.dot_dimension_numbers<[1], [0], [0], [1], [0, 0, 1, 1], [], []>} : vector<8x32xf32>, vector<32x32xf32>, vector<8x32xf32> -> vector<8x32xf32>
    %c0_12 = arith.constant 0 : index
    %c0_13 = arith.constant 0 : index
    %11 = vector.load %arg8[%c0_12, %c0_13] : memref<1x32xf32, #tpu.memory_space<vmem>>, vector<1x32xf32>
    %12 = vector.broadcast %11 : vector<1x32xf32> to vector<8x32xf32>
    %13 = arith.addf %10, %12 : vector<8x32xf32>
    %c0_14 = arith.constant 0 : index
    %c0_15 = arith.constant 0 : index
    %14 = vector.load %arg9[%c0_14, %c0_15] : memref<32x32xf32, #tpu.memory_space<vmem>>, vector<32x32xf32>
    %cst_16 = arith.constant dense<0.000000e+00> : vector<8x32xf32>
    %15 = tpu.matmul %3, %14, %cst_16 {dimension_numbers = #tpu.dot_dimension_numbers<[1], [0], [0], [1], [0, 0, 1, 1], [], []>} : vector<8x32xf32>, vector<32x32xf32>, vector<8x32xf32> -> vector<8x32xf32>
    %c0_17 = arith.constant 0 : index
    %c0_18 = arith.constant 0 : index
    %16 = vector.load %arg10[%c0_17, %c0_18] : memref<1x32xf32, #tpu.memory_space<vmem>>, vector<1x32xf32>
    %17 = vector.broadcast %16 : vector<1x32xf32> to vector<8x32xf32>
    %18 = arith.addf %15, %17 : vector<8x32xf32>
    %cst_19 = arith.constant 0.353553385 : f32
    %19 = vector.broadcast %cst_19 : f32 to vector<8x32xf32>
    %20 = arith.mulf %8, %19 : vector<8x32xf32>
    %c0_20 = arith.constant 0 : index
    %c0_21 = arith.constant 0 : index
    %c0_22 = arith.constant 0 : index
    %c0_23 = arith.constant 0 : index
    %21 = vector.load %arg4[%c0_20, %c0_21, %c0_22, %c0_23] : memref<1x1x1x8xf32, #tpu.memory_space<vmem>>, vector<1x1x1x8xf32>
    %22 = vector.shape_cast %21 : vector<1x1x1x8xf32> to vector<1x8xf32>
    %23 = vector.shape_cast %22 : vector<1x8xf32> to vector<1x8xf32>
    %24 = vector.broadcast %23 : vector<1x8xf32> to vector<8x8xf32>
    %25 = vector.extract_strided_slice %20 {offsets = [0, 0], sizes = [8, 8], strides = [1, 1]} : vector<8x32xf32> to vector<8x8xf32>
    %26 = vector.extract_strided_slice %13 {offsets = [0, 0], sizes = [8, 8], strides = [1, 1]} : vector<8x32xf32> to vector<8x8xf32>
    %27 = vector.extract_strided_slice %18 {offsets = [0, 0], sizes = [8, 8], strides = [1, 1]} : vector<8x32xf32> to vector<8x8xf32>
    %cst_24 = arith.constant dense<0.000000e+00> : vector<8x8xf32>
    %28 = tpu.matmul %25, %26, %cst_24 {dimension_numbers = #tpu.dot_dimension_numbers<[1], [1], [0], [0], [0, 0, 1, 0], [], []>} : vector<8x8xf32>, vector<8x8xf32>, vector<8x8xf32> -> vector<8x8xf32>
    %29 = arith.addf %28, %24 : vector<8x8xf32>
    %c0_25 = arith.constant 0 : index
    %c0_26 = arith.constant 0 : index
    %c0_27 = arith.constant 0 : index
    %c0_28 = arith.constant 0 : index
    %30 = vector.load %arg12[%c0_25, %c0_26, %c0_27, %c0_28] : memref<1x4x8x8xf32, #tpu.memory_space<vmem>>, vector<1x1x8x8xf32>
    %31 = vector.shape_cast %30 : vector<1x1x8x8xf32> to vector<8x8xf32>
    %32 = vector.shape_cast %29 : vector<8x8xf32> to vector<1x1x8x8xf32>
    tpu.vector_store %arg12[%c0_25, %c0_26, %c0_27, %c0_28], %32 {strides = array<i32>} : memref<1x4x8x8xf32, #tpu.memory_space<vmem>>, vector<1x1x8x8xf32>,
    %cst_29 = arith.constant dense<0xFF800000> : vector<8xf32>
    %33 = vector.multi_reduction <maximumf>, %29, %cst_29 [1] : vector<8x8xf32> to vector<8xf32>
    %34 = vector.shape_cast %33 : vector<8xf32> to vector<8x1xf32>
    %35 = vector.broadcast %34 : vector<8x1xf32> to vector<8x8xf32>
    %36 = arith.subf %29, %35 : vector<8x8xf32>
    %37 = math.exp %36 : vector<8x8xf32>
    %cst_30 = arith.constant dense<0.000000e+00> : vector<8xf32>
    %38 = vector.multi_reduction <add>, %37, %cst_30 [1] : vector<8x8xf32> to vector<8xf32>
    %39 = vector.shape_cast %38 : vector<8xf32> to vector<8x1xf32>
    %40 = tpu.reciprocal %39 {approx = true} : vector<8x1xf32> -> vector<8x1xf32>
    %41 = vector.broadcast %40 : vector<8x1xf32> to vector<8x8xf32>
    %42 = arith.mulf %37, %41 : vector<8x8xf32>
    %cst_31 = arith.constant dense<0.000000e+00> : vector<8x8xf32>
    %43 = tpu.matmul %42, %27, %cst_31 {dimension_numbers = #tpu.dot_dimension_numbers<[1], [0], [0], [1], [0, 0, 1, 1], [], []>} : vector<8x8xf32>, vector<8x8xf32>, vector<8x8xf32> -> vector<8x8xf32>
    %c0_32 = arith.constant 0 : index
    %c0_33 = arith.constant 0 : index
    %c0_34 = arith.constant 0 : index
    %44 = vector.load %arg11[%c0_32, %c0_33, %c0_34] : memref<1x8x32xf32, #tpu.memory_space<vmem>>, vector<1x8x8xf32>
    %45 = vector.shape_cast %44 : vector<1x8x8xf32> to vector<8x8xf32>
    %46 = vector.shape_cast %43 : vector<8x8xf32> to vector<1x8x8xf32>
    tpu.vector_store %arg11[%c0_32, %c0_33, %c0_34], %46 {strides = array<i32>} : memref<1x8x32xf32, #tpu.memory_space<vmem>>, vector<1x8x8xf32>,
    %47 = vector.extract_strided_slice %20 {offsets = [0, 8], sizes = [8, 8], strides = [1, 1]} : vector<8x32xf32> to vector<8x8xf32>
    %48 = vector.extract_strided_slice %13 {offsets = [0, 8], sizes = [8, 8], strides = [1, 1]} : vector<8x32xf32> to vector<8x8xf32>
    %49 = vector.extract_strided_slice %18 {offsets = [0, 8], sizes = [8, 8], strides = [1, 1]} : vector<8x32xf32> to vector<8x8xf32>
    %cst_35 = arith.constant dense<0.000000e+00> : vector<8x8xf32>
    %50 = tpu.matmul %47, %48, %cst_35 {dimension_numbers = #tpu.dot_dimension_numbers<[1], [1], [0], [0], [0, 0, 1, 0], [], []>} : vector<8x8xf32>, vector<8x8xf32>, vector<8x8xf32> -> vector<8x8xf32>
    %51 = arith.addf %50, %24 : vector<8x8xf32>
    %c0_36 = arith.constant 0 : index
    %c1 = arith.constant 1 : index
    %c0_37 = arith.constant 0 : index
    %c0_38 = arith.constant 0 : index
    %52 = vector.load %arg12[%c0_36, %c1, %c0_37, %c0_38] : memref<1x4x8x8xf32, #tpu.memory_space<vmem>>, vector<1x1x8x8xf32>
    %53 = vector.shape_cast %52 : vector<1x1x8x8xf32> to vector<8x8xf32>
    %54 = vector.shape_cast %51 : vector<8x8xf32> to vector<1x1x8x8xf32>
    tpu.vector_store %arg12[%c0_36, %c1, %c0_37, %c0_38], %54 {strides = array<i32>} : memref<1x4x8x8xf32, #tpu.memory_space<vmem>>, vector<1x1x8x8xf32>,
    %cst_39 = arith.constant dense<0xFF800000> : vector<8xf32>
    %55 = vector.multi_reduction <maximumf>, %51, %cst_39 [1] : vector<8x8xf32> to vector<8xf32>
    %56 = vector.shape_cast %55 : vector<8xf32> to vector<8x1xf32>
    %57 = vector.broadcast %56 : vector<8x1xf32> to vector<8x8xf32>
    %58 = arith.subf %51, %57 : vector<8x8xf32>
    %59 = math.exp %58 : vector<8x8xf32>
    %cst_40 = arith.constant dense<0.000000e+00> : vector<8xf32>
    %60 = vector.multi_reduction <add>, %59, %cst_40 [1] : vector<8x8xf32> to vector<8xf32>
    %61 = vector.shape_cast %60 : vector<8xf32> to vector<8x1xf32>
    %62 = tpu.reciprocal %61 {approx = true} : vector<8x1xf32> -> vector<8x1xf32>
    %63 = vector.broadcast %62 : vector<8x1xf32> to vector<8x8xf32>
    %64 = arith.mulf %59, %63 : vector<8x8xf32>
    %cst_41 = arith.constant dense<0.000000e+00> : vector<8x8xf32>
    %65 = tpu.matmul %64, %49, %cst_41 {dimension_numbers = #tpu.dot_dimension_numbers<[1], [0], [0], [1], [0, 0, 1, 1], [], []>} : vector<8x8xf32>, vector<8x8xf32>, vector<8x8xf32> -> vector<8x8xf32>
    %c0_42 = arith.constant 0 : index
    %c0_43 = arith.constant 0 : index
    %c8 = arith.constant 8 : index
    %66 = vector.load %arg11[%c0_42, %c0_43, %c8] : memref<1x8x32xf32, #tpu.memory_space<vmem>>, vector<1x8x8xf32>
    %67 = vector.shape_cast %66 : vector<1x8x8xf32> to vector<8x8xf32>
    %68 = vector.shape_cast %65 : vector<8x8xf32> to vector<1x8x8xf32>
    tpu.vector_store %arg11[%c0_42, %c0_43, %c8], %68 {strides = array<i32>} : memref<1x8x32xf32, #tpu.memory_space<vmem>>, vector<1x8x8xf32>,
    %69 = vector.extract_strided_slice %20 {offsets = [0, 16], sizes = [8, 8], strides = [1, 1]} : vector<8x32xf32> to vector<8x8xf32>
    %70 = vector.extract_strided_slice %13 {offsets = [0, 16], sizes = [8, 8], strides = [1, 1]} : vector<8x32xf32> to vector<8x8xf32>
    %71 = vector.extract_strided_slice %18 {offsets = [0, 16], sizes = [8, 8], strides = [1, 1]} : vector<8x32xf32> to vector<8x8xf32>
    %cst_44 = arith.constant dense<0.000000e+00> : vector<8x8xf32>
    %72 = tpu.matmul %69, %70, %cst_44 {dimension_numbers = #tpu.dot_dimension_numbers<[1], [1], [0], [0], [0, 0, 1, 0], [], []>} : vector<8x8xf32>, vector<8x8xf32>, vector<8x8xf32> -> vector<8x8xf32>
    %73 = arith.addf %72, %24 : vector<8x8xf32>
    %c0_45 = arith.constant 0 : index
    %c2 = arith.constant 2 : index
    %c0_46 = arith.constant 0 : index
    %c0_47 = arith.constant 0 : index
    %74 = vector.load %arg12[%c0_45, %c2, %c0_46, %c0_47] : memref<1x4x8x8xf32, #tpu.memory_space<vmem>>, vector<1x1x8x8xf32>
    %75 = vector.shape_cast %74 : vector<1x1x8x8xf32> to vector<8x8xf32>
    %76 = vector.shape_cast %73 : vector<8x8xf32> to vector<1x1x8x8xf32>
    tpu.vector_store %arg12[%c0_45, %c2, %c0_46, %c0_47], %76 {strides = array<i32>} : memref<1x4x8x8xf32, #tpu.memory_space<vmem>>, vector<1x1x8x8xf32>,
    %cst_48 = arith.constant dense<0xFF800000> : vector<8xf32>
    %77 = vector.multi_reduction <maximumf>, %73, %cst_48 [1] : vector<8x8xf32> to vector<8xf32>
    %78 = vector.shape_cast %77 : vector<8xf32> to vector<8x1xf32>
    %79 = vector.broadcast %78 : vector<8x1xf32> to vector<8x8xf32>
    %80 = arith.subf %73, %79 : vector<8x8xf32>
    %81 = math.exp %80 : vector<8x8xf32>
    %cst_49 = arith.constant dense<0.000000e+00> : vector<8xf32>
    %82 = vector.multi_reduction <add>, %81, %cst_49 [1] : vector<8x8xf32> to vector<8xf32>
    %83 = vector.shape_cast %82 : vector<8xf32> to vector<8x1xf32>
    %84 = tpu.reciprocal %83 {approx = true} : vector<8x1xf32> -> vector<8x1xf32>
    %85 = vector.broadcast %84 : vector<8x1xf32> to vector<8x8xf32>
    %86 = arith.mulf %81, %85 : vector<8x8xf32>
    %cst_50 = arith.constant dense<0.000000e+00> : vector<8x8xf32>
    %87 = tpu.matmul %86, %71, %cst_50 {dimension_numbers = #tpu.dot_dimension_numbers<[1], [0], [0], [1], [0, 0, 1, 1], [], []>} : vector<8x8xf32>, vector<8x8xf32>, vector<8x8xf32> -> vector<8x8xf32>
    %c0_51 = arith.constant 0 : index
    %c0_52 = arith.constant 0 : index
    %c16 = arith.constant 16 : index
    %88 = vector.load %arg11[%c0_51, %c0_52, %c16] : memref<1x8x32xf32, #tpu.memory_space<vmem>>, vector<1x8x8xf32>
    %89 = vector.shape_cast %88 : vector<1x8x8xf32> to vector<8x8xf32>
    %90 = vector.shape_cast %87 : vector<8x8xf32> to vector<1x8x8xf32>
    tpu.vector_store %arg11[%c0_51, %c0_52, %c16], %90 {strides = array<i32>} : memref<1x8x32xf32, #tpu.memory_space<vmem>>, vector<1x8x8xf32>,
    %91 = vector.extract_strided_slice %20 {offsets = [0, 24], sizes = [8, 8], strides = [1, 1]} : vector<8x32xf32> to vector<8x8xf32>
    %92 = vector.extract_strided_slice %13 {offsets = [0, 24], sizes = [8, 8], strides = [1, 1]} : vector<8x32xf32> to vector<8x8xf32>
    %93 = vector.extract_strided_slice %18 {offsets = [0, 24], sizes = [8, 8], strides = [1, 1]} : vector<8x32xf32> to vector<8x8xf32>
    %cst_53 = arith.constant dense<0.000000e+00> : vector<8x8xf32>
    %94 = tpu.matmul %91, %92, %cst_53 {dimension_numbers = #tpu.dot_dimension_numbers<[1], [1], [0], [0], [0, 0, 1, 0], [], []>} : vector<8x8xf32>, vector<8x8xf32>, vector<8x8xf32> -> vector<8x8xf32>
    %95 = arith.addf %94, %24 : vector<8x8xf32>
    %c0_54 = arith.constant 0 : index
    %c3 = arith.constant 3 : index
    %c0_55 = arith.constant 0 : index
    %c0_56 = arith.constant 0 : index
    %96 = vector.load %arg12[%c0_54, %c3, %c0_55, %c0_56] : memref<1x4x8x8xf32, #tpu.memory_space<vmem>>, vector<1x1x8x8xf32>
    %97 = vector.shape_cast %96 : vector<1x1x8x8xf32> to vector<8x8xf32>
    %98 = vector.shape_cast %95 : vector<8x8xf32> to vector<1x1x8x8xf32>
    tpu.vector_store %arg12[%c0_54, %c3, %c0_55, %c0_56], %98 {strides = array<i32>} : memref<1x4x8x8xf32, #tpu.memory_space<vmem>>, vector<1x1x8x8xf32>,
    %cst_57 = arith.constant dense<0xFF800000> : vector<8xf32>
    %99 = vector.multi_reduction <maximumf>, %95, %cst_57 [1] : vector<8x8xf32> to vector<8xf32>
    %100 = vector.shape_cast %99 : vector<8xf32> to vector<8x1xf32>
    %101 = vector.broadcast %100 : vector<8x1xf32> to vector<8x8xf32>
    %102 = arith.subf %95, %101 : vector<8x8xf32>
    %103 = math.exp %102 : vector<8x8xf32>
    %cst_58 = arith.constant dense<0.000000e+00> : vector<8xf32>
    %104 = vector.multi_reduction <add>, %103, %cst_58 [1] : vector<8x8xf32> to vector<8xf32>
    %105 = vector.shape_cast %104 : vector<8xf32> to vector<8x1xf32>
    %106 = tpu.reciprocal %105 {approx = true} : vector<8x1xf32> -> vector<8x1xf32>
    %107 = vector.broadcast %106 : vector<8x1xf32> to vector<8x8xf32>
    %108 = arith.mulf %103, %107 : vector<8x8xf32>
    %cst_59 = arith.constant dense<0.000000e+00> : vector<8x8xf32>
    %109 = tpu.matmul %108, %93, %cst_59 {dimension_numbers = #tpu.dot_dimension_numbers<[1], [0], [0], [1], [0, 0, 1, 1], [], []>} : vector<8x8xf32>, vector<8x8xf32>, vector<8x8xf32> -> vector<8x8xf32>
    %c0_60 = arith.constant 0 : index
    %c0_61 = arith.constant 0 : index
    %c24 = arith.constant 24 : index
    %110 = vector.load %arg11[%c0_60, %c0_61, %c24] : memref<1x8x32xf32, #tpu.memory_space<vmem>>, vector<1x8x8xf32>
    %111 = vector.shape_cast %110 : vector<1x8x8xf32> to vector<8x8xf32>
    %112 = vector.shape_cast %109 : vector<8x8xf32> to vector<1x8x8xf32>
    tpu.vector_store %arg11[%c0_60, %c0_61, %c24], %112 {strides = array<i32>} : memref<1x8x32xf32, #tpu.memory_space<vmem>>, vector<1x8x8xf32>,
    return
  }
  func.func @transform_0(%arg0: i32, %arg1: i32) -> (i32, i32, i32) {
    %c0_i32 = arith.constant 0 : i32
    %c0_i32_0 = arith.constant 0 : i32
    return %arg0, %arg1, %c0_i32 : i32, i32, i32
  }
  func.func @transform_1(%arg0: i32, %arg1: i32) -> (i32, i32, i32) {
    %c0_i32 = arith.constant 0 : i32
    %c0_i32_0 = arith.constant 0 : i32
    %c0_i32_1 = arith.constant 0 : i32
    return %arg0, %c0_i32, %c0_i32_0 : i32, i32, i32
  }
  func.func @transform_2(%arg0: i32, %arg1: i32) -> (i32, i32, i32, i32) {
    %c0_i32 = arith.constant 0 : i32
    %c0_i32_0 = arith.constant 0 : i32
    %c0_i32_1 = arith.constant 0 : i32
    %c0_i32_2 = arith.constant 0 : i32
    return %arg0, %c0_i32, %c0_i32_0, %c0_i32_1 : i32, i32, i32, i32
  }
  func.func @transform_3(%arg0: i32, %arg1: i32) -> (i32, i32) {
    %c0_i32 = arith.constant 0 : i32
    %c0_i32_0 = arith.constant 0 : i32
    %c0_i32_1 = arith.constant 0 : i32
    return %c0_i32, %c0_i32_0 : i32, i32
  }
  func.func @transform_4(%arg0: i32, %arg1: i32) -> (i32, i32) {
    %c0_i32 = arith.constant 0 : i32
    %c0_i32_0 = arith.constant 0 : i32
    %c0_i32_1 = arith.constant 0 : i32
    return %c0_i32, %c0_i32_0 : i32, i32
  }
  func.func @transform_5(%arg0: i32, %arg1: i32) -> (i32, i32) {
    %c0_i32 = arith.constant 0 : i32
    %c0_i32_0 = arith.constant 0 : i32
    %c0_i32_1 = arith.constant 0 : i32
    return %c0_i32, %c0_i32_0 : i32, i32
  }
  func.func @transform_6(%arg0: i32, %arg1: i32) -> (i32, i32) {
    %c0_i32 = arith.constant 0 : i32
    %c0_i32_0 = arith.constant 0 : i32
    %c0_i32_1 = arith.constant 0 : i32
    return %c0_i32, %c0_i32_0 : i32, i32
  }
  func.func @transform_7(%arg0: i32, %arg1: i32) -> (i32, i32) {
    %c0_i32 = arith.constant 0 : i32
    %c0_i32_0 = arith.constant 0 : i32
    %c0_i32_1 = arith.constant 0 : i32
    return %c0_i32, %c0_i32_0 : i32, i32
  }
  func.func @transform_8(%arg0: i32, %arg1: i32) -> (i32, i32) {
    %c0_i32 = arith.constant 0 : i32
    %c0_i32_0 = arith.constant 0 : i32
    %c0_i32_1 = arith.constant 0 : i32
    return %c0_i32, %c0_i32_0 : i32, i32
  }
  func.func @transform_9(%arg0: i32, %arg1: i32) -> (i32, i32, i32) {
    %c0_i32 = arith.constant 0 : i32
    %c0_i32_0 = arith.constant 0 : i32
    return %arg0, %arg1, %c0_i32 : i32, i32, i32
  }
  func.func @transform_10(%arg0: i32, %arg1: i32) -> (i32, i32, i32, i32) {
    %c0_i32 = arith.constant 0 : i32
    %c0_i32_0 = arith.constant 0 : i32
    %c0_i32_1 = arith.constant 0 : i32
    return %arg0, %c0_i32, %arg1, %c0_i32_0 : i32, i32, i32, i32
  }
}

</mosaic_0001>

<llo_original>
// kernel: tpu_custom_call.1
$region0: #{tpu_custom_call.1}
  #allocation0 [shape = 'u32[]', space=smem, size = 0x4, offset = 0x4, fixed_abs, tag = 'smem constant byte address 0x4 - core index']
  #allocation1 [shape = 'u32[144,128]{1,0:T(1,128)}', space=vmem, size = 0x12000, scoped, tag = 'internal scratch']
  %s0 = inlined_call_operand.hbm [shape: f32[2,8,32], index: 0, kind: input, shape index: {}]
  %s1 = inlined_call_operand.hbm [shape: f32[2,8,32], index: 1, kind: input, shape index: {}]
  %s2 = inlined_call_operand.vmem [shape: f32[2,1,1,8], index: 2, kind: input, shape index: {}]
  %s3 = inlined_call_operand.hbm [shape: f32[32,32], index: 3, kind: input, shape index: {}]
  %s4 = inlined_call_operand.vmem [shape: f32[1,32], index: 4, kind: input, shape index: {}]
  %s5 = inlined_call_operand.hbm [shape: f32[32,32], index: 5, kind: input, shape index: {}]
  %s6 = inlined_call_operand.vmem [shape: f32[1,32], index: 6, kind: input, shape index: {}]
  %s7 = inlined_call_operand.hbm [shape: f32[32,32], index: 7, kind: input, shape index: {}]
  %s8 = inlined_call_operand.vmem [shape: f32[1,32], index: 8, kind: input, shape index: {}]
  %s9 = inlined_call_operand.hbm [shape: f32[2,8,32], index: 9, kind: output, shape index: {0}]
  %s10 = inlined_call_operand.hbm [shape: f32[2,4,8,8], index: 10, kind: output, shape index: {1}]
  %11 = xla_tuple %s9, %s10
  %s12 = sld [smem:[#allocation0]]
  $region97: #{tpu_custom_call.1} parent=0
    _
  %s14 = ssub.s32 1, %s12
  %s15 = scalar_select 0, %s14, %s12
  $region1: #{tpu_custom_call.1} parent=0
    #allocation2 [shape = 'u8[8192]{0}', space=vmem, size = 0x2000, scoped, tag = 'input window, operand 0']
    #allocation3 [shape = 's32[2]{0}', space=sflag, size = 0x8, scoped, tag = 'scoped memory for tpu_custom_call.1']
    #allocation4 [shape = 's32[2]{0}', space=sflag, size = 0x8, scoped, tag = 'scoped memory for tpu_custom_call.1']
    #allocation5 [shape = 'u8[8192]{0}', space=vmem, size = 0x2000, scoped, tag = 'input window, operand 1']
    #allocation6 [shape = 's32[2]{0}', space=sflag, size = 0x8, scoped, tag = 'scoped memory for tpu_custom_call.1']
    #allocation7 [shape = 'u8[16384]{0}', space=vmem, size = 0x4000, scoped, tag = 'input window, operand 3, single buffered']
    #allocation8 [shape = 'u8[16384]{0}', space=vmem, size = 0x4000, scoped, tag = 'input window, operand 5, single buffered']
    #allocation9 [shape = 's32[1]{0}', space=sflag, size = 0x4, scoped, tag = 'scoped memory for tpu_custom_call.1']
    #allocation10 [shape = 'u8[16384]{0}', space=vmem, size = 0x4000, scoped, tag = 'input window, operand 7, single buffered']
    #allocation11 [shape = 'u8[8192]{0}', space=vmem, size = 0x2000, scoped, tag = 'output window, operand 0']
    #allocation12 [shape = 'u8[32768]{0}', space=vmem, size = 0x8000, scoped, tag = 'output window, operand 1']
    #allocation13 [shape = 's32[2]{0}', space=sflag, size = 0x8, scoped, tag = 'scoped memory for tpu_custom_call.1']
    %16 = vsyncpa [#allocation3], 0
    %s17 = scalar_lea.sflag [#allocation3], 1
    %18 = vsyncpa %s17, 0
    %19 = vsyncpa [#allocation6], 0
    %s20 = scalar_lea.sflag [#allocation6], 1
    %21 = vsyncpa %s20, 0
    %22 = vsyncpa [#allocation9], 0
    %23 = vsyncpa [#allocation4], 0
    %s24 = scalar_lea.sflag [#allocation4], 1
    %25 = vsyncpa %s24, 0
    %26 = vsyncpa [#allocation13], 0
    %s27 = scalar_lea.sflag [#allocation13], 1
    %28 = vsyncpa %s27, 0
    loop: start=0, step=1, limit=4
    $region2: #{tpu_custom_call.1} parent=1 // loop_pre_header
      _
    $region3: #{tpu_custom_call.1} parent=1 // loop_header
      %s30 = sphi 0, %s34
      %p31 = scmp.ge.s32.totalorder %s30, 4
      %s37 = sphi 0, %s49
      %s38 = sphi 0, %s45
      %s39 = sphi 0, %s37
      %s40 = sphi 0, %s38
      %s41 = sphi 0, %s39
      %s42 = sphi 0, %s40
      %s54 = sphi 0, %s56
      %s57 = sphi 0, %s54
      %s58 = sphi 0, %s57
      %s74 = sphi 0, %s58
      %s80 = sphi 0, %s82
      %s83 = sphi 0, %s80
      %s84 = sphi 0, %s83
      %s100 = sphi 0, %s84
      %s106 = sphi 0, %s108
      %s109 = sphi 0, %s106
      %s110 = sphi 0, %s109
      %s126 = sphi 0, %s110
      %s130 = sphi 0, %s130
      %s132 = sphi 0, %s130
      %s133 = sphi 0, %s132
      %s147 = sphi 0, %s133
      %s151 = sphi 0, %s151
      %s153 = sphi 0, %s151
      %s154 = sphi 0, %s153
      %s168 = sphi 0, %s154
      %s172 = sphi 0, %s172
      %s174 = sphi 0, %s172
      %s175 = sphi 0, %s174
      %s189 = sphi 0, %s175
      %s193 = sphi 0, %s193
      %s195 = sphi 0, %s193
      %s196 = sphi 0, %s195
      %s210 = sphi 0, %s196
      %s214 = sphi 0, %s214
      %s216 = sphi 0, %s214
      %s217 = sphi 0, %s216
      %s231 = sphi 0, %s217
      %s235 = sphi 0, %s235
      %s237 = sphi 0, %s235
      %s238 = sphi 0, %s237
      %s252 = sphi 0, %s238
      %s260 = sphi 0, %s262
      %s263 = sphi 0, %s260
      %s264 = sphi 0, %s263
      %s280 = sphi 0, %s264
      %s288 = sphi 0, %s290
      %s291 = sphi 0, %s288
      %s292 = sphi 0, %s291
      %s308 = sphi 0, %s292
    $region4: #{tpu_custom_call.1} parent=1 // loop_header_branch
      %33 = sbr.rel (%p31) target = $region8
    $region5: #{tpu_custom_call.1} parent=1 // loop_body
      %s35 = ssub.s32 %s30, 1
      %s36 = ssub.s32 %s30, 2
      %s43 = sadd.s32 1, %s38
      %p44 = scmp.ge.s32.totalorder %s43, 1
      %s45 = scalar_select %p44, 0, %s43
      %s46 = sadd.s32 1, %s37
      %s47 = scalar_select %p44, %s46, %s37
      %p48 = scmp.ge.s32.totalorder %s47, 2
      %s49 = scalar_select %p48, 0, %s47
      %s50 = ssub.s32 %s37, %s49
      %s51 = ssub.s32 %s38, %s45
      %s52 = sor.u32 %s50, %s51
      %p53 = scmp.eq.s32.totalorder %s52, 0
      %s55 = sadd.s32 %s54, 1
      %s56 = scalar_select %p53, %s54, %s55
      %p59 = pneg %p53
      %p60 = scmp.eq.s32.totalorder %s30, 1
      %p61 = por %p59, %p60
      %p62 = scmp.ne.s32.totalorder %s54, %s57
      %p63 = scmp.eq.s32.totalorder %s30, 0
      %p64 = por %p62, %p63
      %p65 = scmp.ne.s32.totalorder %s54, %s57
      %p66 = scmp.eq.s32.totalorder %s35, 1
      %p67 = por %p65, %p66
      %p68 = scmp.ne.s32.totalorder %s57, %s58
      %p69 = scmp.eq.s32.totalorder %s35, 0
      %p70 = por %p68, %p69
      %p71 = scmp.ne.s32.totalorder %s57, %s58
      %p72 = scmp.eq.s32.totalorder %s36, 1
      %p73 = por %p71, %p72
      %p75 = scmp.ne.s32.totalorder %s58, %s74
      %p76 = scmp.eq.s32.totalorder %s36, 0
      %p77 = por %p75, %p76
      %s78 = ssub.s32 %s37, %s49
      %p79 = scmp.eq.s32.totalorder %s78, 0
      %s81 = sadd.s32 %s80, 1
      %s82 = scalar_select %p79, %s80, %s81
      %p85 = pneg %p79
      %p86 = scmp.eq.s32.totalorder %s30, 1
      %p87 = por %p85, %p86
      %p88 = scmp.ne.s32.totalorder %s80, %s83
      %p89 = scmp.eq.s32.totalorder %s30, 0
      %p90 = por %p88, %p89
      %p91 = scmp.ne.s32.totalorder %s80, %s83
      %p92 = scmp.eq.s32.totalorder %s35, 1
      %p93 = por %p91, %p92
      %p94 = scmp.ne.s32.totalorder %s83, %s84
      %p95 = scmp.eq.s32.totalorder %s35, 0
      %p96 = por %p94, %p95
      %p97 = scmp.ne.s32.totalorder %s83, %s84
      %p98 = scmp.eq.s32.totalorder %s36, 1
      %p99 = por %p97, %p98
      %p101 = scmp.ne.s32.totalorder %s84, %s100
      %p102 = scmp.eq.s32.totalorder %s36, 0
      %p103 = por %p101, %p102
      %s104 = ssub.s32 %s37, %s49
      %p105 = scmp.eq.s32.totalorder %s104, 0
      %s107 = sadd.s32 %s106, 1
      %s108 = scalar_select %p105, %s106, %s107
      %p111 = pneg %p105
      %p112 = scmp.eq.s32.totalorder %s30, 1
      %p113 = por %p111, %p112
      %p114 = scmp.ne.s32.totalorder %s106, %s109
      %p115 = scmp.eq.s32.totalorder %s30, 0
      %p116 = por %p114, %p115
      %p117 = scmp.ne.s32.totalorder %s106, %s109
      %p118 = scmp.eq.s32.totalorder %s35, 1
      %p119 = por %p117, %p118
      %p120 = scmp.ne.s32.totalorder %s109, %s110
      %p121 = scmp.eq.s32.totalorder %s35, 0
      %p122 = por %p120, %p121
      %p123 = scmp.ne.s32.totalorder %s109, %s110
      %p124 = scmp.eq.s32.totalorder %s36, 1
      %p125 = por %p123, %p124
      %p127 = scmp.ne.s32.totalorder %s110, %s126
      %p128 = scmp.eq.s32.totalorder %s36, 0
      %p129 = por %p127, %p128
      %s131 = sadd.s32 %s130, 1
      %p134 = scmp.eq.s32.totalorder %s30, 1
      %p135 = scmp.ne.s32.totalorder %s130, %s132
      %p136 = scmp.eq.s32.totalorder %s30, 0
      %p137 = por %p135, %p136
      %p138 = scmp.ne.s32.totalorder %s130, %s132
      %p139 = scmp.eq.s32.totalorder %s35, 1
      %p140 = por %p138, %p139
      %p141 = scmp.ne.s32.totalorder %s132, %s133
      %p142 = scmp.eq.s32.totalorder %s35, 0
      %p143 = por %p141, %p142
      %p144 = scmp.ne.s32.totalorder %s132, %s133
      %p145 = scmp.eq.s32.totalorder %s36, 1
      %p146 = por %p144, %p145
      %p148 = scmp.ne.s32.totalorder %s133, %s147
      %p149 = scmp.eq.s32.totalorder %s36, 0
      %p150 = por %p148, %p149
      %s152 = sadd.s32 %s151, 1
      %p155 = scmp.eq.s32.totalorder %s30, 1
      %p156 = scmp.ne.s32.totalorder %s151, %s153
      %p157 = scmp.eq.s32.totalorder %s30, 0
      %p158 = por %p156, %p157
      %p159 = scmp.ne.s32.totalorder %s151, %s153
      %p160 = scmp.eq.s32.totalorder %s35, 1
      %p161 = por %p159, %p160
      %p162 = scmp.ne.s32.totalorder %s153, %s154
      %p163 = scmp.eq.s32.totalorder %s35, 0
      %p164 = por %p162, %p163
      %p165 = scmp.ne.s32.totalorder %s153, %s154
      %p166 = scmp.eq.s32.totalorder %s36, 1
      %p167 = por %p165, %p166
      %p169 = scmp.ne.s32.totalorder %s154, %s168
      %p170 = scmp.eq.s32.totalorder %s36, 0
      %p171 = por %p169, %p170
      %s173 = sadd.s32 %s172, 1
      %p176 = scmp.eq.s32.totalorder %s30, 1
      %p177 = scmp.ne.s32.totalorder %s172, %s174
      %p178 = scmp.eq.s32.totalorder %s30, 0
      %p179 = por %p177, %p178
      %p180 = scmp.ne.s32.totalorder %s172, %s174
      %p181 = scmp.eq.s32.totalorder %s35, 1
      %p182 = por %p180, %p181
      %p183 = scmp.ne.s32.totalorder %s174, %s175
      %p184 = scmp.eq.s32.totalorder %s35, 0
      %p185 = por %p183, %p184
      %p186 = scmp.ne.s32.totalorder %s174, %s175
      %p187 = scmp.eq.s32.totalorder %s36, 1
      %p188 = por %p186, %p187
      %p190 = scmp.ne.s32.totalorder %s175, %s189
      %p191 = scmp.eq.s32.totalorder %s36, 0
      %p192 = por %p190, %p191
      %s194 = sadd.s32 %s193, 1
      %p197 = scmp.eq.s32.totalorder %s30, 1
      %p198 = scmp.ne.s32.totalorder %s193, %s195
      %p199 = scmp.eq.s32.totalorder %s30, 0
      %p200 = por %p198, %p199
      %p201 = scmp.ne.s32.totalorder %s193, %s195
      %p202 = scmp.eq.s32.totalorder %s35, 1
      %p203 = por %p201, %p202
      %p204 = scmp.ne.s32.totalorder %s195, %s196
      %p205 = scmp.eq.s32.totalorder %s35, 0
      %p206 = por %p204, %p205
      %p207 = scmp.ne.s32.totalorder %s195, %s196
      %p208 = scmp.eq.s32.totalorder %s36, 1
      %p209 = por %p207, %p208
      %p211 = scmp.ne.s32.totalorder %s196, %s210
      %p212 = scmp.eq.s32.totalorder %s36, 0
      %p213 = por %p211, %p212
      %s215 = sadd.s32 %s214, 1
      %p218 = scmp.eq.s32.totalorder %s30, 1
      %p219 = scmp.ne.s32.totalorder %s214, %s216
      %p220 = scmp.eq.s32.totalorder %s30, 0
      %p221 = por %p219, %p220
      %p222 = scmp.ne.s32.totalorder %s214, %s216
      %p223 = scmp.eq.s32.totalorder %s35, 1
      %p224 = por %p222, %p223
      %p225 = scmp.ne.s32.totalorder %s216, %s217
      %p226 = scmp.eq.s32.totalorder %s35, 0
      %p227 = por %p225, %p226
      %p228 = scmp.ne.s32.totalorder %s216, %s217
      %p229 = scmp.eq.s32.totalorder %s36, 1
      %p230 = por %p228, %p229
      %p232 = scmp.ne.s32.totalorder %s217, %s231
      %p233 = scmp.eq.s32.totalorder %s36, 0
      %p234 = por %p232, %p233
      %s236 = sadd.s32 %s235, 1
      %p239 = scmp.eq.s32.totalorder %s30, 1
      %p240 = scmp.ne.s32.totalorder %s235, %s237
      %p241 = scmp.eq.s32.totalorder %s30, 0
      %p242 = por %p240, %p241
      %p243 = scmp.ne.s32.totalorder %s235, %s237
      %p244 = scmp.eq.s32.totalorder %s35, 1
      %p245 = por %p243, %p244
      %p246 = scmp.ne.s32.totalorder %s237, %s238
      %p247 = scmp.eq.s32.totalorder %s35, 0
      %p248 = por %p246, %p247
      %p249 = scmp.ne.s32.totalorder %s237, %s238
      %p250 = scmp.eq.s32.totalorder %s36, 1
      %p251 = por %p249, %p250
      %p253 = scmp.ne.s32.totalorder %s238, %s252
      %p254 = scmp.eq.s32.totalorder %s36, 0
      %p255 = por %p253, %p254
      %s256 = ssub.s32 %s37, %s49
      %s257 = ssub.s32 %s38, %s45
      %s258 = sor.u32 %s256, %s257
      %p259 = scmp.eq.s32.totalorder %s258, 0
      %s261 = sadd.s32 %s260, 1
      %s262 = scalar_select %p259, %s260, %s261
      %p265 = pneg %p259
      %p266 = scmp.eq.s32.totalorder %s30, 1
      %p267 = por %p265, %p266
      %p268 = scmp.ne.s32.totalorder %s260, %s263
      %p269 = scmp.eq.s32.totalorder %s30, 0
      %p270 = por %p268, %p269
      %p271 = scmp.ne.s32.totalorder %s260, %s263
      %p272 = scmp.eq.s32.totalorder %s35, 1
      %p273 = por %p271, %p272
      %p274 = scmp.ne.s32.totalorder %s263, %s264
      %p275 = scmp.eq.s32.totalorder %s35, 0
      %p276 = por %p274, %p275
      %p277 = scmp.ne.s32.totalorder %s263, %s264
      %p278 = scmp.eq.s32.totalorder %s36, 1
      %p279 = por %p277, %p278
      %p281 = scmp.ne.s32.totalorder %s264, %s280
      %p282 = scmp.eq.s32.totalorder %s36, 0
      %p283 = por %p281, %p282
      %s284 = ssub.s32 %s37, %s49
      %s285 = ssub.s32 %s38, %s45
      %s286 = sor.u32 %s284, %s285
      %p287 = scmp.eq.s32.totalorder %s286, 0
      %s289 = sadd.s32 %s288, 1
      %s290 = scalar_select %p287, %s288, %s289
      %p293 = pneg %p287
      %p294 = scmp.eq.s32.totalorder %s30, 1
      %p295 = por %p293, %p294
      %p296 = scmp.ne.s32.totalorder %s288, %s291
      %p297 = scmp.eq.s32.totalorder %s30, 0
      %p298 = por %p296, %p297
      %p299 = scmp.ne.s32.totalorder %s288, %s291
      %p300 = scmp.eq.s32.totalorder %s35, 1
      %p301 = por %p299, %p300
      %p302 = scmp.ne.s32.totalorder %s291, %s292
      %p303 = scmp.eq.s32.totalorder %s35, 0
      %p304 = por %p302, %p303
      %p305 = scmp.ne.s32.totalorder %s291, %s292
      %p306 = scmp.eq.s32.totalorder %s36, 1
      %p307 = por %p305, %p306
      %p309 = scmp.ne.s32.totalorder %s292, %s308
      %p310 = scmp.eq.s32.totalorder %s36, 0
      %p311 = por %p309, %p310
      %p312 = scmp.le.s32.totalorder 1, %s30
      %p313 = scmp.lt.s32.totalorder %s30, 3
      %p314 = pnand %p312, %p313
      %p315 = pneg %p314
      // Predicated region
      $region9: #{tpu_custom_call.1} parent=5 // pred_check
        _
      $region10: #{tpu_custom_call.1} parent=5 // pred_check_branch
        %317 = sbr.rel (%p314) target = $region12
      $region11: #{tpu_custom_call.1} parent=5 // pred_region
        %s318 = ssub.s32 %s30, 1
        // Predicated region
        $region13: #{tpu_custom_call.1} parent=11 // pred_check
          %p319 = pneg %p143
        $region14: #{tpu_custom_call.1} parent=11 // pred_check_branch
          %321 = sbr.rel (%p319) target = $region16
        $region15: #{tpu_custom_call.1} parent=11 // pred_region
          %s323 = ssub.s32 512, 512
          %324 = vsyncadd [#allocation6], %s323
          %s325 = sshll.u32 [#allocation7], 4
          %s326 = int_to_ptr.vmem [resolvable:$true] %s325
          %331 = dma.hbm_to_vmem [thread:$0]  %s3, 512, %s326, [#allocation6], 128, 128, 8
        $region16: #{tpu_custom_call.1} parent=11 // pred_fallthru
          _
        // Predicated region
        $region17: #{tpu_custom_call.1} parent=11 // pred_check
          %p332 = pneg %p164
        $region18: #{tpu_custom_call.1} parent=11 // pred_check_branch
          %334 = sbr.rel (%p332) target = $region20
        $region19: #{tpu_custom_call.1} parent=11 // pred_region
          _
        $region20: #{tpu_custom_call.1} parent=11 // pred_fallthru
          _
        // Predicated region
        $region21: #{tpu_custom_call.1} parent=11 // pred_check
          %p335 = pneg %p185
        $region22: #{tpu_custom_call.1} parent=11 // pred_check_branch
          %337 = sbr.rel (%p335) target = $region24
        $region23: #{tpu_custom_call.1} parent=11 // pred_region
          %s339 = ssub.s32 512, 512
          %340 = vsyncadd [#allocation9], %s339
          %s341 = sshll.u32 [#allocation8], 4
          %s342 = int_to_ptr.vmem [resolvable:$true] %s341
          %347 = dma.hbm_to_vmem [thread:$0]  %s5, 512, %s342, [#allocation9], 128, 128, 8
        $region24: #{tpu_custom_call.1} parent=11 // pred_fallthru
          _
        // Predicated region
        $region25: #{tpu_custom_call.1} parent=11 // pred_check
          %p348 = pneg %p206
        $region26: #{tpu_custom_call.1} parent=11 // pred_check_branch
          %350 = sbr.rel (%p348) target = $region28
        $region27: #{tpu_custom_call.1} parent=11 // pred_region
          _
        $region28: #{tpu_custom_call.1} parent=11 // pred_fallthru
          _
        // Predicated region
        $region29: #{tpu_custom_call.1} parent=11 // pred_check
          %p351 = pneg %p227
        $region30: #{tpu_custom_call.1} parent=11 // pred_check_branch
          %353 = sbr.rel (%p351) target = $region32
        $region31: #{tpu_custom_call.1} parent=11 // pred_region
          %s355 = ssub.s32 512, 512
          %356 = vsyncadd [#allocation9], %s355
          %s357 = sshll.u32 [#allocation10], 4
          %s358 = int_to_ptr.vmem [resolvable:$true] %s357
          %363 = dma.hbm_to_vmem [thread:$0]  %s7, 512, %s358, [#allocation9], 128, 128, 8
        $region32: #{tpu_custom_call.1} parent=11 // pred_fallthru
          _
        // Predicated region
        $region33: #{tpu_custom_call.1} parent=11 // pred_check
          %p364 = pneg %p248
        $region34: #{tpu_custom_call.1} parent=11 // pred_check_branch
          %366 = sbr.rel (%p364) target = $region36
        $region35: #{tpu_custom_call.1} parent=11 // pred_region
          _
        $region36: #{tpu_custom_call.1} parent=11 // pred_fallthru
          _
      $region12: #{tpu_custom_call.1} parent=5 // pred_fallthru
        _
      %p367 = scmp.lt.s32.totalorder %s30, 2
      // Predicated region
      $region37: #{tpu_custom_call.1} parent=5 // pred_check
        %p368 = pneg %p367
      $region38: #{tpu_custom_call.1} parent=5 // pred_check_branch
        %370 = sbr.rel (%p368) target = $region40
      $region39: #{tpu_custom_call.1} parent=5 // pred_region
        // Predicated region
        $region41: #{tpu_custom_call.1} parent=39 // pred_check
          %p371 = pneg %p64
        $region42: #{tpu_custom_call.1} parent=39 // pred_check_branch
          %373 = sbr.rel (%p371) target = $region44
        $region43: #{tpu_custom_call.1} parent=39 // pred_region
          %s374 = sand.u32 %s54, 1
          %s375 = scalar_lea.sflag [#allocation3], %s374
          %s376 = sand.u32 %s54, 1
          %s377 = smul.addr %s376, 8
          %s378 = scalar_lea.vmem [#allocation2], %s377
          %s380 = ssub.s32 128, 128
          %381 = vsyncadd %s375, %s380
          %s382 = sadd.s32 %s38, %s37
          %s383 = smul.addr %s382, 128
          %s384 = scalar_lea.hbm %s0, %s383
          %s386 = sshll.u32 %s378, 4
          %s387 = int_to_ptr.vmem [resolvable:$true] %s386
          %389 = dma.hbm_to_vmem [thread:$0]  %s384, 128, %s387, %s375
        $region44: #{tpu_custom_call.1} parent=39 // pred_fallthru
          _
        // Predicated region
        $region45: #{tpu_custom_call.1} parent=39 // pred_check
          %p390 = pneg %p90
        $region46: #{tpu_custom_call.1} parent=39 // pred_check_branch
          %392 = sbr.rel (%p390) target = $region48
        $region47: #{tpu_custom_call.1} parent=39 // pred_region
          %s393 = sand.u32 %s30, 1
          %s394 = scalar_lea.sflag [#allocation6], %s393
          %s395 = sand.u32 %s80, 1
          %s396 = smul.addr %s395, 8
          %s397 = scalar_lea.vmem [#allocation5], %s396
          %s399 = ssub.s32 128, 128
          %400 = vsyncadd %s394, %s399
          %s401 = smul.addr %s37, 128
          %s402 = scalar_lea.hbm %s1, %s401
          %s404 = sshll.u32 %s397, 4
          %s405 = int_to_ptr.vmem [resolvable:$true] %s404
          %407 = dma.hbm_to_vmem [thread:$0]  %s402, 128, %s405, %s394
        $region48: #{tpu_custom_call.1} parent=39 // pred_fallthru
          _
        // Predicated region
        $region49: #{tpu_custom_call.1} parent=39 // pred_check
          %p408 = pneg %p116
        $region50: #{tpu_custom_call.1} parent=39 // pred_check_branch
          %410 = sbr.rel (%p408) target = $region52
        $region51: #{tpu_custom_call.1} parent=39 // pred_region
          %p411 = scmp.lt.s32.totalorder %s37, 1
          %s412 = scalar_select %p411, %s37, 1
          %s413 = scalar_lea.vmem %s2, %s412
        $region52: #{tpu_custom_call.1} parent=39 // pred_fallthru
          _
      $region40: #{tpu_custom_call.1} parent=5 // pred_fallthru
        _
      %p414 = scmp.le.s32.totalorder 1, %s30
      %p415 = scmp.lt.s32.totalorder %s30, 3
      %p416 = pnand %p414, %p415
      %p417 = pneg %p416
      // Predicated region
      $region53: #{tpu_custom_call.1} parent=5 // pred_check
        _
      $region54: #{tpu_custom_call.1} parent=5 // pred_check_branch
        %419 = sbr.rel (%p416) target = $region56
      $region55: #{tpu_custom_call.1} parent=5 // pred_region
        %s420 = ssub.s32 %s30, 1
        %s421 = sand.u32 %s57, 1
        %s422 = scalar_lea.sflag [#allocation3], %s421
        %s423 = sand.u32 %s57, 1
        %s424 = smul.addr %s423, 8
        %s425 = scalar_lea.vmem [#allocation2], %s424
        // Predicated region
        $region57: #{tpu_custom_call.1} parent=55 // pred_check
          %p426 = pneg %p70
        $region58: #{tpu_custom_call.1} parent=55 // pred_check_branch
          %428 = sbr.rel (%p426) target = $region60
        $region59: #{tpu_custom_call.1} parent=55 // pred_region
          %429 = dma.done %s422, 128
        $region60: #{tpu_custom_call.1} parent=55 // pred_fallthru
          _
        %s430 = sand.u32 %s35, 1
        %s431 = scalar_lea.sflag [#allocation6], %s430
        %s432 = sand.u32 %s83, 1
        %s433 = smul.addr %s432, 8
        %s434 = scalar_lea.vmem [#allocation5], %s433
        // Predicated region
        $region61: #{tpu_custom_call.1} parent=55 // pred_check
          %p435 = pneg %p96
        $region62: #{tpu_custom_call.1} parent=55 // pred_check_branch
          %437 = sbr.rel (%p435) target = $region64
        $region63: #{tpu_custom_call.1} parent=55 // pred_region
          %438 = dma.done %s431, 128
        $region64: #{tpu_custom_call.1} parent=55 // pred_fallthru
          _
        // Predicated region
        $region65: #{tpu_custom_call.1} parent=55 // pred_check
          %p439 = pneg %p143
        $region66: #{tpu_custom_call.1} parent=55 // pred_check_branch
          %441 = sbr.rel (%p439) target = $region68
        $region67: #{tpu_custom_call.1} parent=55 // pred_region
          %442 = dma.done [#allocation6], 512
        $region68: #{tpu_custom_call.1} parent=55 // pred_fallthru
          _
        // Predicated region
        $region69: #{tpu_custom_call.1} parent=55 // pred_check
          %p443 = pneg %p185
        $region70: #{tpu_custom_call.1} parent=55 // pred_check_branch
          %445 = sbr.rel (%p443) target = $region72
        $region71: #{tpu_custom_call.1} parent=55 // pred_region
          %446 = dma.done [#allocation9], 512
        $region72: #{tpu_custom_call.1} parent=55 // pred_fallthru
          _
        // Predicated region
        $region73: #{tpu_custom_call.1} parent=55 // pred_check
          %p447 = pneg %p227
        $region74: #{tpu_custom_call.1} parent=55 // pred_check_branch
          %449 = sbr.rel (%p447) target = $region76
        $region75: #{tpu_custom_call.1} parent=55 // pred_region
          %450 = dma.done [#allocation9], 512
        $region76: #{tpu_custom_call.1} parent=55 // pred_fallthru
          _
        %s451 = sand.u32 %s57, 1
        %s452 = scalar_lea.sflag [#allocation3], %s451
        %s453 = sand.u32 %s57, 1
        %s454 = smul.addr %s453, 8
        %s455 = scalar_lea.vmem [#allocation2], %s454
        %p456 = pneg %p70
        %p457 = pneg %p67
        %s458 = sand.u32 %s35, 1
        %s459 = scalar_lea.sflag [#allocation6], %s458
        %s460 = sand.u32 %s83, 1
        %s461 = smul.addr %s460, 8
        %s462 = scalar_lea.vmem [#allocation5], %s461
        %p463 = pneg %p96
        %p464 = pneg %p93
        %p465 = scmp.lt.s32.totalorder %s39, 1
        %s466 = scalar_select %p465, %s39, 1
        %s467 = scalar_lea.vmem %s2, %s466
        %p468 = pneg %p122
        %p469 = pneg %p119
        %p470 = pneg %p143
        %p471 = pneg %p140
        %p472 = pneg %p164
        %p473 = pneg %p161
        %p474 = pneg %p185
        %p475 = pneg %p182
        %p476 = pneg %p206
        %p477 = pneg %p203
        %p478 = pneg %p227
        %p479 = pneg %p224
        %p480 = pneg %p248
        %p481 = pneg %p245
        %p482 = pneg %p276
        %p483 = pneg %p273
        %s484 = sand.u32 %s263, 1
        %s485 = scalar_lea.sflag [#allocation4], %s484
        %s486 = sand.u32 %s263, 1
        %s487 = smul.addr %s486, 8
        %s488 = scalar_lea.vmem [#allocation11], %s487
        %p489 = pneg %p304
        %p490 = pneg %p301
        %s491 = sand.u32 %s291, 1
        %s492 = scalar_lea.sflag [#allocation13], %s491
        %s493 = sand.u32 %s291, 1
        %s494 = smul.addr %s493, 32
        %s495 = scalar_lea.vmem [#allocation12], %s494
        %p496 = scmp.lt.s32.totalorder %s39, 1
        %s497 = scalar_select %p496, %s39, 1
        %s498 = scalar_lea.vmem %s2, %s497
        %v499 = vld [vmem:[%s425] sm:$0xff]
        %v500 = vld [vmem:[%s434] sm:$0xff]
        %v501 = vld [vmem:[#allocation7] sm:$0xff]
        %v502 = vld [vmem:[#allocation7 + $0x8] sm:$0xff]
        %v503 = vld [vmem:[#allocation7 + $0x10] sm:$0xff]
        %v504 = vld [vmem:[#allocation7 + $0x18] sm:$0xff]
        %v505 = vld [vmem:[%s4] sm:$0x1]
        %v507 = vlaneseq
        %v508 = vshrl.u32 %v507, 7
        %v509 = vsub.s32 0, %v508
        %v510 = vrot.slane %v505, %v509
        %vm512 = vcmask 261120
        %v514 = vsel %vm512, %v499, 0
        %516 = vmatprep.subr.mxu0 0.0
        %517 = vmatpush1.msra.mxu0 %v501
        %518 = vmatprep.subr.mxu0 0.0
        %519 = vmatpush1.msra.mxu0 %v502
        %520 = vmatprep.subr.mxu0 0.0
        %521 = vmatpush1.msra.mxu0 %v503
        %522 = vmatprep.subr.mxu0 0.0
        %523 = vmatpush1.msra.mxu0 %v504
        %524 = vmatprep.subr.mxu0 0.0
        %525 = vmatpush1.msra.mxu0 0.0
        %526 = vmatprep.subr.mxu0 0.0
        %527 = vmatpush1.msra.mxu0 0.0
        %528 = vmatprep.subr.mxu0 0.0
        %529 = vmatpush1.msra.mxu0 0.0
        %530 = vmatprep.subr.mxu0 0.0
        %531 = vmatpush1.msra.mxu0 0.0
        %532 = vmatprep.subr.mxu0 0.0
        %533 = vmatpush1.msra.mxu0 0.0
        %534 = vmatprep.subr.mxu0 0.0
        %535 = vmatpush1.msra.mxu0 0.0
        %536 = vmatprep.subr.mxu0 0.0
        %537 = vmatpush1.msra.mxu0 0.0
        %538 = vmatprep.subr.mxu0 0.0
        %539 = vmatpush1.msra.mxu0 0.0
        %540 = vmatprep.subr.mxu0 0.0
        %541 = vmatpush1.msra.mxu0 0.0
        %542 = vmatprep.subr.mxu0 0.0
        %543 = vmatpush1.msra.mxu0 0.0
        %544 = vmatprep.subr.mxu0 0.0
        %545 = vmatpush1.msra.mxu0 0.0
        %546 = vmatprep.subr.mxu0 0.0
        %547 = vmatpush1.msra.mxu0 0.0
        %548 = vmatprep.subr.mxu0 0.0
        %549 = vmatpush1.msra.mxu0 0.0
        %550 = vmatprep.subr.mxu0 0.0
        %551 = vmatpush1.msra.mxu0 0.0
        %552 = vmatprep.subr.mxu0 0.0
        %553 = vmatpush1.msra.mxu0 0.0
        %554 = vmatprep.subr.mxu0 0.0
        %555 = vmatpush1.msra.mxu0 0.0
        %556 = vmatprep.subr.mxu0 0.0
        %557 = vmatpush1.msra.mxu0 0.0
        %558 = vmatprep.subr.mxu0 0.0
        %559 = vmatpush1.msra.mxu0 0.0
        %560 = vmatprep.subr.mxu0 0.0
        %561 = vmatpush1.msra.mxu0 0.0
        %562 = vmatprep.subr.mxu0 0.0
        %563 = vmatpush1.msra.mxu0 0.0
        %564 = vmatprep.subr.mxu0 0.0
        %565 = vmatpush1.msra.mxu0 0.0
        %566 = vmatprep.subr.mxu0 0.0
        %567 = vmatpush1.msra.mxu0 0.0
        %568 = vmatprep.subr.mxu0 0.0
        %569 = vmatpush1.msra.mxu0 0.0
        %570 = vmatprep.subr.mxu0 0.0
        %571 = vmatpush1.msra.mxu0 0.0
        %572 = vmatprep.subr.mxu0 0.0
        %573 = vmatpush1.msra.mxu0 0.0
        %574 = vmatprep.subr.mxu0 0.0
        %575 = vmatpush1.msra.mxu0 0.0
        %576 = vmatprep.subr.mxu0 0.0
        %577 = vmatpush1.msra.mxu0 0.0
        %578 = vmatprep.subr.mxu0 0.0
        %579 = vmatpush1.msra.mxu0 0.0
        %580 = vmatprep.mubr.f32.mxu0 0.0
        %581 = vmatmul.mubr.f32.gmra.mrb[0].mxu0 %v514
        %v582 = vpop.f32.mrb[0].mxu0
        %v583 = vadd.f32 %v510, %v582
        %v584 = vpop.f32.mrb[0].mxu0
        %585 = vdwg.mxu0
        %v586 = vld [vmem:[#allocation8] sm:$0xff]
        %v587 = vld [vmem:[#allocation8 + $0x8] sm:$0xff]
        %v588 = vld [vmem:[#allocation8 + $0x10] sm:$0xff]
        %v589 = vld [vmem:[#allocation8 + $0x18] sm:$0xff]
        %v590 = vld [vmem:[%s6] sm:$0x1]
        %v592 = vlaneseq
        %v593 = vshrl.u32 %v592, 7
        %v594 = vsub.s32 0, %v593
        %v595 = vrot.slane %v590, %v594
        %v598 = vsel %vm512, %v500, 0
        %600 = vmatprep.subr.mxu0 0.0
        %601 = vmatpush1.msra.mxu0 %v586
        %602 = vmatprep.subr.mxu0 0.0
        %603 = vmatpush1.msra.mxu0 %v587
        %604 = vmatprep.subr.mxu0 0.0
        %605 = vmatpush1.msra.mxu0 %v588
        %606 = vmatprep.subr.mxu0 0.0
        %607 = vmatpush1.msra.mxu0 %v589
        %608 = vmatprep.subr.mxu0 0.0
        %609 = vmatpush1.msra.mxu0 0.0
        %610 = vmatprep.subr.mxu0 0.0
        %611 = vmatpush1.msra.mxu0 0.0
        %612 = vmatprep.subr.mxu0 0.0
        %613 = vmatpush1.msra.mxu0 0.0
        %614 = vmatprep.subr.mxu0 0.0
        %615 = vmatpush1.msra.mxu0 0.0
        %616 = vmatprep.subr.mxu0 0.0
        %617 = vmatpush1.msra.mxu0 0.0
        %618 = vmatprep.subr.mxu0 0.0
        %619 = vmatpush1.msra.mxu0 0.0
        %620 = vmatprep.subr.mxu0 0.0
        %621 = vmatpush1.msra.mxu0 0.0
        %622 = vmatprep.subr.mxu0 0.0
        %623 = vmatpush1.msra.mxu0 0.0
        %624 = vmatprep.subr.mxu0 0.0
        %625 = vmatpush1.msra.mxu0 0.0
        %626 = vmatprep.subr.mxu0 0.0
        %627 = vmatpush1.msra.mxu0 0.0
        %628 = vmatprep.subr.mxu0 0.0
        %629 = vmatpush1.msra.mxu0 0.0
        %630 = vmatprep.subr.mxu0 0.0
        %631 = vmatpush1.msra.mxu0 0.0
        %632 = vmatprep.subr.mxu0 0.0
        %633 = vmatpush1.msra.mxu0 0.0
        %634 = vmatprep.subr.mxu0 0.0
        %635 = vmatpush1.msra.mxu0 0.0
        %636 = vmatprep.subr.mxu0 0.0
        %637 = vmatpush1.msra.mxu0 0.0
        %638 = vmatprep.subr.mxu0 0.0
        %639 = vmatpush1.msra.mxu0 0.0
        %640 = vmatprep.subr.mxu0 0.0
        %641 = vmatpush1.msra.mxu0 0.0
        %642 = vmatprep.subr.mxu0 0.0
        %643 = vmatpush1.msra.mxu0 0.0
        %644 = vmatprep.subr.mxu0 0.0
        %645 = vmatpush1.msra.mxu0 0.0
        %646 = vmatprep.subr.mxu0 0.0
        %647 = vmatpush1.msra.mxu0 0.0
        %648 = vmatprep.subr.mxu0 0.0
        %649 = vmatpush1.msra.mxu0 0.0
        %650 = vmatprep.subr.mxu0 0.0
        %651 = vmatpush1.msra.mxu0 0.0
        %652 = vmatprep.subr.mxu0 0.0
        %653 = vmatpush1.msra.mxu0 0.0
        %654 = vmatprep.subr.mxu0 0.0
        %655 = vmatpush1.msra.mxu0 0.0
        %656 = vmatprep.subr.mxu0 0.0
        %657 = vmatpush1.msra.mxu0 0.0
        %658 = vmatprep.subr.mxu0 0.0
        %659 = vmatpush1.msra.mxu0 0.0
        %660 = vmatprep.subr.mxu0 0.0
        %661 = vmatpush1.msra.mxu0 0.0
        %662 = vmatprep.subr.mxu0 0.0
        %663 = vmatpush1.msra.mxu0 0.0
        %664 = vmatprep.mubr.f32.mxu0 0.0
        %665 = vmatmul.mubr.f32.gmra.mrb[0].mxu0 %v598
        %v666 = vpop.f32.mrb[0].mxu0
        %v667 = vadd.f32 %v595, %v666
        %v668 = vpop.f32.mrb[0].mxu0
        %669 = vdwg.mxu0
        %v670 = vld [vmem:[#allocation10] sm:$0xff]
        %v671 = vld [vmem:[#allocation10 + $0x8] sm:$0xff]
        %v672 = vld [vmem:[#allocation10 + $0x10] sm:$0xff]
        %v673 = vld [vmem:[#allocation10 + $0x18] sm:$0xff]
        %v674 = vld [vmem:[%s8] sm:$0x1]
        %v676 = vlaneseq
        %v677 = vshrl.u32 %v676, 7
        %v678 = vsub.s32 0, %v677
        %v679 = vrot.slane %v674, %v678
        %681 = vmatprep.subr.mxu0 0.0
        %682 = vmatpush1.msra.mxu0 %v670
        %683 = vmatprep.subr.mxu0 0.0
        %684 = vmatpush1.msra.mxu0 %v671
        %685 = vmatprep.subr.mxu0 0.0
        %686 = vmatpush1.msra.mxu0 %v672
        %687 = vmatprep.subr.mxu0 0.0
        %688 = vmatpush1.msra.mxu0 %v673
        %689 = vmatprep.subr.mxu0 0.0
        %690 = vmatpush1.msra.mxu0 0.0
        %691 = vmatprep.subr.mxu0 0.0
        %692 = vmatpush1.msra.mxu0 0.0
        %693 = vmatprep.subr.mxu0 0.0
        %694 = vmatpush1.msra.mxu0 0.0
        %695 = vmatprep.subr.mxu0 0.0
        %696 = vmatpush1.msra.mxu0 0.0
        %697 = vmatprep.subr.mxu0 0.0
        %698 = vmatpush1.msra.mxu0 0.0
        %699 = vmatprep.subr.mxu0 0.0
        %700 = vmatpush1.msra.mxu0 0.0
        %701 = vmatprep.subr.mxu0 0.0
        %702 = vmatpush1.msra.mxu0 0.0
        %703 = vmatprep.subr.mxu0 0.0
        %704 = vmatpush1.msra.mxu0 0.0
        %705 = vmatprep.subr.mxu0 0.0
        %706 = vmatpush1.msra.mxu0 0.0
        %707 = vmatprep.subr.mxu0 0.0
        %708 = vmatpush1.msra.mxu0 0.0
        %709 = vmatprep.subr.mxu0 0.0
        %710 = vmatpush1.msra.mxu0 0.0
        %711 = vmatprep.subr.mxu0 0.0
        %712 = vmatpush1.msra.mxu0 0.0
        %713 = vmatprep.subr.mxu0 0.0
        %714 = vmatpush1.msra.mxu0 0.0
        %715 = vmatprep.subr.mxu0 0.0
        %716 = vmatpush1.msra.mxu0 0.0
        %717 = vmatprep.subr.mxu0 0.0
        %718 = vmatpush1.msra.mxu0 0.0
        %719 = vmatprep.subr.mxu0 0.0
        %720 = vmatpush1.msra.mxu0 0.0
        %721 = vmatprep.subr.mxu0 0.0
        %722 = vmatpush1.msra.mxu0 0.0
        %723 = vmatprep.subr.mxu0 0.0
        %724 = vmatpush1.msra.mxu0 0.0
        %725 = vmatprep.subr.mxu0 0.0
        %726 = vmatpush1.msra.mxu0 0.0
        %727 = vmatprep.subr.mxu0 0.0
        %728 = vmatpush1.msra.mxu0 0.0
        %729 = vmatprep.subr.mxu0 0.0
        %730 = vmatpush1.msra.mxu0 0.0
        %731 = vmatprep.subr.mxu0 0.0
        %732 = vmatpush1.msra.mxu0 0.0
        %733 = vmatprep.subr.mxu0 0.0
        %734 = vmatpush1.msra.mxu0 0.0
        %735 = vmatprep.subr.mxu0 0.0
        %736 = vmatpush1.msra.mxu0 0.0
        %737 = vmatprep.subr.mxu0 0.0
        %738 = vmatpush1.msra.mxu0 0.0
        %739 = vmatprep.subr.mxu0 0.0
        %740 = vmatpush1.msra.mxu0 0.0
        %741 = vmatprep.subr.mxu0 0.0
        %742 = vmatpush1.msra.mxu0 0.0
        %743 = vmatprep.subr.mxu0 0.0
        %744 = vmatpush1.msra.mxu0 0.0
        %745 = vmatprep.mubr.f32.mxu0 0.0
        %746 = vmatmul.mubr.f32.gmra.mrb[0].mxu0 %v598
        %v747 = vpop.f32.mrb[0].mxu0
        %v748 = vadd.f32 %v679, %v747
        %v749 = vpop.f32.mrb[0].mxu0
        %750 = vdwg.mxu0
        %v751 = vmul.f32 %v583, 0.35355338
        %v752 = vld [vmem:[%s498] sm:$0x1]
        %v754 = vlaneseq
        %v755 = vshrl.u32 %v754, 7
        %v756 = vsub.s32 0, %v755
        %v757 = vrot.slane %v752, %v756
        %vm759 = vcmask 64512
        %v761 = vsel %vm759, %v751, 0
        %v764 = vsel %vm759, %v667, 0
        %766 = vmatprep.subr.mxu0 0.0
        %767 = vmatpush1.xpose.msra.mxu0 %v764
        %768 = vmatprep.subr.mxu0 0.0
        %769 = vmatpush1.xpose.msra.mxu0 0.0
        %770 = vmatprep.subr.mxu0 0.0
        %771 = vmatpush1.xpose.msra.mxu0 0.0
        %772 = vmatprep.subr.mxu0 0.0
        %773 = vmatpush1.xpose.msra.mxu0 0.0
        %774 = vmatprep.subr.mxu0 0.0
        %775 = vmatpush1.xpose.msra.mxu0 0.0
        %776 = vmatprep.subr.mxu0 0.0
        %777 = vmatpush1.xpose.msra.mxu0 0.0
        %778 = vmatprep.subr.mxu0 0.0
        %779 = vmatpush1.xpose.msra.mxu0 0.0
        %780 = vmatprep.subr.mxu0 0.0
        %781 = vmatpush1.xpose.msra.mxu0 0.0
        %782 = vmatprep.subr.mxu0 0.0
        %783 = vmatpush1.xpose.msra.mxu0 0.0
        %784 = vmatprep.subr.mxu0 0.0
        %785 = vmatpush1.xpose.msra.mxu0 0.0
        %786 = vmatprep.subr.mxu0 0.0
        %787 = vmatpush1.xpose.msra.mxu0 0.0
        %788 = vmatprep.subr.mxu0 0.0
        %789 = vmatpush1.xpose.msra.mxu0 0.0
        %790 = vmatprep.subr.mxu0 0.0
        %791 = vmatpush1.xpose.msra.mxu0 0.0
        %792 = vmatprep.subr.mxu0 0.0
        %793 = vmatpush1.xpose.msra.mxu0 0.0
        %794 = vmatprep.subr.mxu0 0.0
        %795 = vmatpush1.xpose.msra.mxu0 0.0
        %796 = vmatprep.subr.mxu0 0.0
        %797 = vmatpush1.xpose.msra.mxu0 0.0
        %798 = vmatprep.subr.mxu0 0.0
        %799 = vmatpush1.xpose.msra.mxu0 0.0
        %800 = vmatprep.subr.mxu0 0.0
        %801 = vmatpush1.xpose.msra.mxu0 0.0
        %802 = vmatprep.subr.mxu0 0.0
        %803 = vmatpush1.xpose.msra.mxu0 0.0
        %804 = vmatprep.subr.mxu0 0.0
        %805 = vmatpush1.xpose.msra.mxu0 0.0
        %806 = vmatprep.subr.mxu0 0.0
        %807 = vmatpush1.xpose.msra.mxu0 0.0
        %808 = vmatprep.subr.mxu0 0.0
        %809 = vmatpush1.xpose.msra.mxu0 0.0
        %810 = vmatprep.subr.mxu0 0.0
        %811 = vmatpush1.xpose.msra.mxu0 0.0
        %812 = vmatprep.subr.mxu0 0.0
        %813 = vmatpush1.xpose.msra.mxu0 0.0
        %814 = vmatprep.subr.mxu0 0.0
        %815 = vmatpush1.xpose.msra.mxu0 0.0
        %816 = vmatprep.subr.mxu0 0.0
        %817 = vmatpush1.xpose.msra.mxu0 0.0
        %818 = vmatprep.subr.mxu0 0.0
        %819 = vmatpush1.xpose.msra.mxu0 0.0
        %820 = vmatprep.subr.mxu0 0.0
        %821 = vmatpush1.xpose.msra.mxu0 0.0
        %822 = vmatprep.subr.mxu0 0.0
        %823 = vmatpush1.xpose.msra.mxu0 0.0
        %824 = vmatprep.subr.mxu0 0.0
        %825 = vmatpush1.xpose.msra.mxu0 0.0
        %826 = vmatprep.subr.mxu0 0.0
        %827 = vmatpush1.xpose.msra.mxu0 0.0
        %828 = vmatprep.subr.mxu0 0.0
        %829 = vmatpush1.xpose.msra.mxu0 0.0
        %830 = vmatprep.mubr.f32.mxu0 0.0
        %831 = vmatmul.mubr.f32.gmra.mrb[0].mxu0 %v761
        %v832 = vpop.f32.mrb[0].mxu0
        %v833 = vadd.f32 %v757, %v832
        %v834 = vpop.f32.mrb[0].mxu0
        %835 = vdwg.mxu0
        %836 = vst.msk [vmem:[%s495] sm:$0xff] %vm759, %v833
        %v837 = vsel %vm759, %v833, -inf
        %838 = vmax.xlane.f32.xlu0 %v837
        %v839 = vpop.xlane.xlu0 %838
        %v840 = vsub.f32 %v833, %v839
        %v841 = vmul.f32 %v840, 1.442695
        %v842 = vpow.pop %v841
        %v843 = vsel %vm759, %v842, 0.0
        %844 = vadd.xlane.f32.xlu0 %v843
        %v845 = vpop.xlane.xlu0 %844
        %v846 = vrcp.pop %v845
        %v847 = vmul.f32 %v842, %v846
        %v849 = vsel %vm759, %v847, 0
        %851 = vmatprep.subr.mxu0 0.0
        %852 = vmatpush1.msra.mxu0 %v748
        %853 = vmatprep.subr.mxu0 0.0
        %854 = vmatpush1.msra.mxu0 0.0
        %855 = vmatprep.subr.mxu0 0.0
        %856 = vmatpush1.msra.mxu0 0.0
        %857 = vmatprep.subr.mxu0 0.0
        %858 = vmatpush1.msra.mxu0 0.0
        %859 = vmatprep.subr.mxu0 0.0
        %860 = vmatpush1.msra.mxu0 0.0
        %861 = vmatprep.subr.mxu0 0.0
        %862 = vmatpush1.msra.mxu0 0.0
        %863 = vmatprep.subr.mxu0 0.0
        %864 = vmatpush1.msra.mxu0 0.0
        %865 = vmatprep.subr.mxu0 0.0
        %866 = vmatpush1.msra.mxu0 0.0
        %867 = vmatprep.subr.mxu0 0.0
        %868 = vmatpush1.msra.mxu0 0.0
        %869 = vmatprep.subr.mxu0 0.0
        %870 = vmatpush1.msra.mxu0 0.0
        %871 = vmatprep.subr.mxu0 0.0
        %872 = vmatpush1.msra.mxu0 0.0
        %873 = vmatprep.subr.mxu0 0.0
        %874 = vmatpush1.msra.mxu0 0.0
        %875 = vmatprep.subr.mxu0 0.0
        %876 = vmatpush1.msra.mxu0 0.0
        %877 = vmatprep.subr.mxu0 0.0
        %878 = vmatpush1.msra.mxu0 0.0
        %879 = vmatprep.subr.mxu0 0.0
        %880 = vmatpush1.msra.mxu0 0.0
        %881 = vmatprep.subr.mxu0 0.0
        %882 = vmatpush1.msra.mxu0 0.0
        %883 = vmatprep.subr.mxu0 0.0
        %884 = vmatpush1.msra.mxu0 0.0
        %885 = vmatprep.subr.mxu0 0.0
        %886 = vmatpush1.msra.mxu0 0.0
        %887 = vmatprep.subr.mxu0 0.0
        %888 = vmatpush1.msra.mxu0 0.0
        %889 = vmatprep.subr.mxu0 0.0
        %890 = vmatpush1.msra.mxu0 0.0
        %891 = vmatprep.subr.mxu0 0.0
        %892 = vmatpush1.msra.mxu0 0.0
        %893 = vmatprep.subr.mxu0 0.0
        %894 = vmatpush1.msra.mxu0 0.0
        %895 = vmatprep.subr.mxu0 0.0
        %896 = vmatpush1.msra.mxu0 0.0
        %897 = vmatprep.subr.mxu0 0.0
        %898 = vmatpush1.msra.mxu0 0.0
        %899 = vmatprep.subr.mxu0 0.0
        %900 = vmatpush1.msra.mxu0 0.0
        %901 = vmatprep.subr.mxu0 0.0
        %902 = vmatpush1.msra.mxu0 0.0
        %903 = vmatprep.subr.mxu0 0.0
        %904 = vmatpush1.msra.mxu0 0.0
        %905 = vmatprep.subr.mxu0 0.0
        %906 = vmatpush1.msra.mxu0 0.0
        %907 = vmatprep.subr.mxu0 0.0
        %908 = vmatpush1.msra.mxu0 0.0
        %909 = vmatprep.subr.mxu0 0.0
        %910 = vmatpush1.msra.mxu0 0.0
        %911 = vmatprep.subr.mxu0 0.0
        %912 = vmatpush1.msra.mxu0 0.0
        %913 = vmatprep.subr.mxu0 0.0
        %914 = vmatpush1.msra.mxu0 0.0
        %915 = vmatprep.mubr.f32.mxu0 0.0
        %916 = vmatmul.mubr.f32.gmra.mrb[0].mxu0 %v849
        %v917 = vpop.f32.mrb[0].mxu0
        %v918 = vadd.f32 0.0, %v917
        %v919 = vpop.f32.mrb[0].mxu0
        %920 = vdwg.mxu0
        %921 = vst.msk [vmem:[%s488] sm:$0xff] %vm759, %v918
        %922 = vrot.lane.b32.xlu0 %v751, 120
        %v923 = vpop.permute.xlu0 %922
        %924 = vrot.lane.b32.xlu0 %v667, 120
        %v925 = vpop.permute.xlu0 %924
        %v926 = vsel %vm759, %v923, 0
        %v928 = vsel %vm759, %v925, 0
        %930 = vmatprep.subr.mxu0 0.0
        %931 = vmatpush1.xpose.msra.mxu0 %v928
        %932 = vmatprep.subr.mxu0 0.0
        %933 = vmatpush1.xpose.msra.mxu0 0.0
        %934 = vmatprep.subr.mxu0 0.0
        %935 = vmatpush1.xpose.msra.mxu0 0.0
        %936 = vmatprep.subr.mxu0 0.0
        %937 = vmatpush1.xpose.msra.mxu0 0.0
        %938 = vmatprep.subr.mxu0 0.0
        %939 = vmatpush1.xpose.msra.mxu0 0.0
        %940 = vmatprep.subr.mxu0 0.0
        %941 = vmatpush1.xpose.msra.mxu0 0.0
        %942 = vmatprep.subr.mxu0 0.0
        %943 = vmatpush1.xpose.msra.mxu0 0.0
        %944 = vmatprep.subr.mxu0 0.0
        %945 = vmatpush1.xpose.msra.mxu0 0.0
        %946 = vmatprep.subr.mxu0 0.0
        %947 = vmatpush1.xpose.msra.mxu0 0.0
        %948 = vmatprep.subr.mxu0 0.0
        %949 = vmatpush1.xpose.msra.mxu0 0.0
        %950 = vmatprep.subr.mxu0 0.0
        %951 = vmatpush1.xpose.msra.mxu0 0.0
        %952 = vmatprep.subr.mxu0 0.0
        %953 = vmatpush1.xpose.msra.mxu0 0.0
        %954 = vmatprep.subr.mxu0 0.0
        %955 = vmatpush1.xpose.msra.mxu0 0.0
        %956 = vmatprep.subr.mxu0 0.0
        %957 = vmatpush1.xpose.msra.mxu0 0.0
        %958 = vmatprep.subr.mxu0 0.0
        %959 = vmatpush1.xpose.msra.mxu0 0.0
        %960 = vmatprep.subr.mxu0 0.0
        %961 = vmatpush1.xpose.msra.mxu0 0.0
        %962 = vmatprep.subr.mxu0 0.0
        %963 = vmatpush1.xpose.msra.mxu0 0.0
        %964 = vmatprep.subr.mxu0 0.0
        %965 = vmatpush1.xpose.msra.mxu0 0.0
        %966 = vmatprep.subr.mxu0 0.0
        %967 = vmatpush1.xpose.msra.mxu0 0.0
        %968 = vmatprep.subr.mxu0 0.0
        %969 = vmatpush1.xpose.msra.mxu0 0.0
        %970 = vmatprep.subr.mxu0 0.0
        %971 = vmatpush1.xpose.msra.mxu0 0.0
        %972 = vmatprep.subr.mxu0 0.0
        %973 = vmatpush1.xpose.msra.mxu0 0.0
        %974 = vmatprep.subr.mxu0 0.0
        %975 = vmatpush1.xpose.msra.mxu0 0.0
        %976 = vmatprep.subr.mxu0 0.0
        %977 = vmatpush1.xpose.msra.mxu0 0.0
        %978 = vmatprep.subr.mxu0 0.0
        %979 = vmatpush1.xpose.msra.mxu0 0.0
        %980 = vmatprep.subr.mxu0 0.0
        %981 = vmatpush1.xpose.msra.mxu0 0.0
        %982 = vmatprep.subr.mxu0 0.0
        %983 = vmatpush1.xpose.msra.mxu0 0.0
        %984 = vmatprep.subr.mxu0 0.0
        %985 = vmatpush1.xpose.msra.mxu0 0.0
        %986 = vmatprep.subr.mxu0 0.0
        %987 = vmatpush1.xpose.msra.mxu0 0.0
        %988 = vmatprep.subr.mxu0 0.0
        %989 = vmatpush1.xpose.msra.mxu0 0.0
        %990 = vmatprep.subr.mxu0 0.0
        %991 = vmatpush1.xpose.msra.mxu0 0.0
        %992 = vmatprep.subr.mxu0 0.0
        %993 = vmatpush1.xpose.msra.mxu0 0.0
        %994 = vmatprep.mubr.f32.mxu0 0.0
        %995 = vmatmul.mubr.f32.gmra.mrb[0].mxu0 %v926
        %v996 = vpop.f32.mrb[0].mxu0
        %v997 = vadd.f32 %v757, %v996
        %v998 = vpop.f32.mrb[0].mxu0
        %999 = vdwg.mxu0
        %s1000 = scalar_lea.vmem %s495, 8 [#allocation12]
        %1001 = vst.msk [vmem:[%s1000] sm:$0xff] %vm759, %v997
        %v1002 = vsel %vm759, %v997, -inf
        %1003 = vmax.xlane.f32.xlu0 %v1002
        %v1004 = vpop.xlane.xlu0 %1003
        %v1005 = vsub.f32 %v997, %v1004
        %v1006 = vmul.f32 %v1005, 1.442695
        %v1007 = vpow.pop %v1006
        %v1008 = vsel %vm759, %v1007, 0.0
        %1009 = vadd.xlane.f32.xlu0 %v1008
        %v1010 = vpop.xlane.xlu0 %1009
        %v1011 = vrcp.pop %v1010
        %v1012 = vmul.f32 %v1007, %v1011
        %1014 = vrot.lane.b32.xlu0 %v748, 120
        %v1015 = vpop.permute.xlu0 %1014
        %v1018 = vsel %vm759, %v1012, 0
        %1020 = vmatprep.subr.mxu0 0.0
        %1021 = vmatpush1.msra.mxu0 %v1015
        %1022 = vmatprep.subr.mxu0 0.0
        %1023 = vmatpush1.msra.mxu0 0.0
        %1024 = vmatprep.subr.mxu0 0.0
        %1025 = vmatpush1.msra.mxu0 0.0
        %1026 = vmatprep.subr.mxu0 0.0
        %1027 = vmatpush1.msra.mxu0 0.0
        %1028 = vmatprep.subr.mxu0 0.0
        %1029 = vmatpush1.msra.mxu0 0.0
        %1030 = vmatprep.subr.mxu0 0.0
        %1031 = vmatpush1.msra.mxu0 0.0
        %1032 = vmatprep.subr.mxu0 0.0
        %1033 = vmatpush1.msra.mxu0 0.0
        %1034 = vmatprep.subr.mxu0 0.0
        %1035 = vmatpush1.msra.mxu0 0.0
        %1036 = vmatprep.subr.mxu0 0.0
        %1037 = vmatpush1.msra.mxu0 0.0
        %1038 = vmatprep.subr.mxu0 0.0
        %1039 = vmatpush1.msra.mxu0 0.0
        %1040 = vmatprep.subr.mxu0 0.0
        %1041 = vmatpush1.msra.mxu0 0.0
        %1042 = vmatprep.subr.mxu0 0.0
        %1043 = vmatpush1.msra.mxu0 0.0
        %1044 = vmatprep.subr.mxu0 0.0
        %1045 = vmatpush1.msra.mxu0 0.0
        %1046 = vmatprep.subr.mxu0 0.0
        %1047 = vmatpush1.msra.mxu0 0.0
        %1048 = vmatprep.subr.mxu0 0.0
        %1049 = vmatpush1.msra.mxu0 0.0
        %1050 = vmatprep.subr.mxu0 0.0
        %1051 = vmatpush1.msra.mxu0 0.0
        %1052 = vmatprep.subr.mxu0 0.0
        %1053 = vmatpush1.msra.mxu0 0.0
        %1054 = vmatprep.subr.mxu0 0.0
        %1055 = vmatpush1.msra.mxu0 0.0
        %1056 = vmatprep.subr.mxu0 0.0
        %1057 = vmatpush1.msra.mxu0 0.0
        %1058 = vmatprep.subr.mxu0 0.0
        %1059 = vmatpush1.msra.mxu0 0.0
        %1060 = vmatprep.subr.mxu0 0.0
        %1061 = vmatpush1.msra.mxu0 0.0
        %1062 = vmatprep.subr.mxu0 0.0
        %1063 = vmatpush1.msra.mxu0 0.0
        %1064 = vmatprep.subr.mxu0 0.0
        %1065 = vmatpush1.msra.mxu0 0.0
        %1066 = vmatprep.subr.mxu0 0.0
        %1067 = vmatpush1.msra.mxu0 0.0
        %1068 = vmatprep.subr.mxu0 0.0
        %1069 = vmatpush1.msra.mxu0 0.0
        %1070 = vmatprep.subr.mxu0 0.0
        %1071 = vmatpush1.msra.mxu0 0.0
        %1072 = vmatprep.subr.mxu0 0.0
        %1073 = vmatpush1.msra.mxu0 0.0
        %1074 = vmatprep.subr.mxu0 0.0
        %1075 = vmatpush1.msra.mxu0 0.0
        %1076 = vmatprep.subr.mxu0 0.0
        %1077 = vmatpush1.msra.mxu0 0.0
        %1078 = vmatprep.subr.mxu0 0.0
        %1079 = vmatpush1.msra.mxu0 0.0
        %1080 = vmatprep.subr.mxu0 0.0
        %1081 = vmatpush1.msra.mxu0 0.0
        %1082 = vmatprep.subr.mxu0 0.0
        %1083 = vmatpush1.msra.mxu0 0.0
        %1084 = vmatprep.mubr.f32.mxu0 0.0
        %1085 = vmatmul.mubr.f32.gmra.mrb[0].mxu0 %v1018
        %v1086 = vpop.f32.mrb[0].mxu0
        %v1087 = vadd.f32 0.0, %v1086
        %v1088 = vpop.f32.mrb[0].mxu0
        %1089 = vdwg.mxu0
        %1091 = vrot.lane.b32.xlu0 %v1087, 8
        %v1092 = vpop.permute.xlu0 %1091
        %vm1094 = vcmask 130112
        %1095 = vst.msk [vmem:[%s488] sm:$0xff] %vm1094, %v1092
        %1096 = vrot.lane.b32.xlu0 %v751, 112
        %v1097 = vpop.permute.xlu0 %1096
        %1098 = vrot.lane.b32.xlu0 %v667, 112
        %v1099 = vpop.permute.xlu0 %1098
        %v1100 = vsel %vm759, %v1097, 0
        %v1102 = vsel %vm759, %v1099, 0
        %1104 = vmatprep.subr.mxu0 0.0
        %1105 = vmatpush1.xpose.msra.mxu0 %v1102
        %1106 = vmatprep.subr.mxu0 0.0
        %1107 = vmatpush1.xpose.msra.mxu0 0.0
        %1108 = vmatprep.subr.mxu0 0.0
        %1109 = vmatpush1.xpose.msra.mxu0 0.0
        %1110 = vmatprep.subr.mxu0 0.0
        %1111 = vmatpush1.xpose.msra.mxu0 0.0
        %1112 = vmatprep.subr.mxu0 0.0
        %1113 = vmatpush1.xpose.msra.mxu0 0.0
        %1114 = vmatprep.subr.mxu0 0.0
        %1115 = vmatpush1.xpose.msra.mxu0 0.0
        %1116 = vmatprep.subr.mxu0 0.0
        %1117 = vmatpush1.xpose.msra.mxu0 0.0
        %1118 = vmatprep.subr.mxu0 0.0
        %1119 = vmatpush1.xpose.msra.mxu0 0.0
        %1120 = vmatprep.subr.mxu0 0.0
        %1121 = vmatpush1.xpose.msra.mxu0 0.0
        %1122 = vmatprep.subr.mxu0 0.0
        %1123 = vmatpush1.xpose.msra.mxu0 0.0
        %1124 = vmatprep.subr.mxu0 0.0
        %1125 = vmatpush1.xpose.msra.mxu0 0.0
        %1126 = vmatprep.subr.mxu0 0.0
        %1127 = vmatpush1.xpose.msra.mxu0 0.0
        %1128 = vmatprep.subr.mxu0 0.0
        %1129 = vmatpush1.xpose.msra.mxu0 0.0
        %1130 = vmatprep.subr.mxu0 0.0
        %1131 = vmatpush1.xpose.msra.mxu0 0.0
        %1132 = vmatprep.subr.mxu0 0.0
        %1133 = vmatpush1.xpose.msra.mxu0 0.0
        %1134 = vmatprep.subr.mxu0 0.0
        %1135 = vmatpush1.xpose.msra.mxu0 0.0
        %1136 = vmatprep.subr.mxu0 0.0
        %1137 = vmatpush1.xpose.msra.mxu0 0.0
        %1138 = vmatprep.subr.mxu0 0.0
        %1139 = vmatpush1.xpose.msra.mxu0 0.0
        %1140 = vmatprep.subr.mxu0 0.0
        %1141 = vmatpush1.xpose.msra.mxu0 0.0
        %1142 = vmatprep.subr.mxu0 0.0
        %1143 = vmatpush1.xpose.msra.mxu0 0.0
        %1144 = vmatprep.subr.mxu0 0.0
        %1145 = vmatpush1.xpose.msra.mxu0 0.0
        %1146 = vmatprep.subr.mxu0 0.0
        %1147 = vmatpush1.xpose.msra.mxu0 0.0
        %1148 = vmatprep.subr.mxu0 0.0
        %1149 = vmatpush1.xpose.msra.mxu0 0.0
        %1150 = vmatprep.subr.mxu0 0.0
        %1151 = vmatpush1.xpose.msra.mxu0 0.0
        %1152 = vmatprep.subr.mxu0 0.0
        %1153 = vmatpush1.xpose.msra.mxu0 0.0
        %1154 = vmatprep.subr.mxu0 0.0
        %1155 = vmatpush1.xpose.msra.mxu0 0.0
        %1156 = vmatprep.subr.mxu0 0.0
        %1157 = vmatpush1.xpose.msra.mxu0 0.0
        %1158 = vmatprep.subr.mxu0 0.0
        %1159 = vmatpush1.xpose.msra.mxu0 0.0
        %1160 = vmatprep.subr.mxu0 0.0
        %1161 = vmatpush1.xpose.msra.mxu0 0.0
        %1162 = vmatprep.subr.mxu0 0.0
        %1163 = vmatpush1.xpose.msra.mxu0 0.0
        %1164 = vmatprep.subr.mxu0 0.0
        %1165 = vmatpush1.xpose.msra.mxu0 0.0
        %1166 = vmatprep.subr.mxu0 0.0
        %1167 = vmatpush1.xpose.msra.mxu0 0.0
        %1168 = vmatprep.mubr.f32.mxu0 0.0
        %1169 = vmatmul.mubr.f32.gmra.mrb[0].mxu0 %v1100
        %v1170 = vpop.f32.mrb[0].mxu0
        %v1171 = vadd.f32 %v757, %v1170
        %v1172 = vpop.f32.mrb[0].mxu0
        %1173 = vdwg.mxu0
        %s1174 = scalar_lea.vmem %s495, 16 [#allocation12]
        %1175 = vst.msk [vmem:[%s1174] sm:$0xff] %vm759, %v1171
        %v1176 = vsel %vm759, %v1171, -inf
        %1177 = vmax.xlane.f32.xlu0 %v1176
        %v1178 = vpop.xlane.xlu0 %1177
        %v1179 = vsub.f32 %v1171, %v1178
        %v1180 = vmul.f32 %v1179, 1.442695
        %v1181 = vpow.pop %v1180
        %v1182 = vsel %vm759, %v1181, 0.0
        %1183 = vadd.xlane.f32.xlu0 %v1182
        %v1184 = vpop.xlane.xlu0 %1183
        %v1185 = vrcp.pop %v1184
        %v1186 = vmul.f32 %v1181, %v1185
        %1187 = vrot.lane.b32.xlu0 %v748, 112
        %v1188 = vpop.permute.xlu0 %1187
        %v1191 = vsel %vm759, %v1186, 0
        %1193 = vmatprep.subr.mxu0 0.0
        %1194 = vmatpush1.msra.mxu0 %v1188
        %1195 = vmatprep.subr.mxu0 0.0
        %1196 = vmatpush1.msra.mxu0 0.0
        %1197 = vmatprep.subr.mxu0 0.0
        %1198 = vmatpush1.msra.mxu0 0.0
        %1199 = vmatprep.subr.mxu0 0.0
        %1200 = vmatpush1.msra.mxu0 0.0
        %1201 = vmatprep.subr.mxu0 0.0
        %1202 = vmatpush1.msra.mxu0 0.0
        %1203 = vmatprep.subr.mxu0 0.0
        %1204 = vmatpush1.msra.mxu0 0.0
        %1205 = vmatprep.subr.mxu0 0.0
        %1206 = vmatpush1.msra.mxu0 0.0
        %1207 = vmatprep.subr.mxu0 0.0
        %1208 = vmatpush1.msra.mxu0 0.0
        %1209 = vmatprep.subr.mxu0 0.0
        %1210 = vmatpush1.msra.mxu0 0.0
        %1211 = vmatprep.subr.mxu0 0.0
        %1212 = vmatpush1.msra.mxu0 0.0
        %1213 = vmatprep.subr.mxu0 0.0
        %1214 = vmatpush1.msra.mxu0 0.0
        %1215 = vmatprep.subr.mxu0 0.0
        %1216 = vmatpush1.msra.mxu0 0.0
        %1217 = vmatprep.subr.mxu0 0.0
        %1218 = vmatpush1.msra.mxu0 0.0
        %1219 = vmatprep.subr.mxu0 0.0
        %1220 = vmatpush1.msra.mxu0 0.0
        %1221 = vmatprep.subr.mxu0 0.0
        %1222 = vmatpush1.msra.mxu0 0.0
        %1223 = vmatprep.subr.mxu0 0.0
        %1224 = vmatpush1.msra.mxu0 0.0
        %1225 = vmatprep.subr.mxu0 0.0
        %1226 = vmatpush1.msra.mxu0 0.0
        %1227 = vmatprep.subr.mxu0 0.0
        %1228 = vmatpush1.msra.mxu0 0.0
        %1229 = vmatprep.subr.mxu0 0.0
        %1230 = vmatpush1.msra.mxu0 0.0
        %1231 = vmatprep.subr.mxu0 0.0
        %1232 = vmatpush1.msra.mxu0 0.0
        %1233 = vmatprep.subr.mxu0 0.0
        %1234 = vmatpush1.msra.mxu0 0.0
        %1235 = vmatprep.subr.mxu0 0.0
        %1236 = vmatpush1.msra.mxu0 0.0
        %1237 = vmatprep.subr.mxu0 0.0
        %1238 = vmatpush1.msra.mxu0 0.0
        %1239 = vmatprep.subr.mxu0 0.0
        %1240 = vmatpush1.msra.mxu0 0.0
        %1241 = vmatprep.subr.mxu0 0.0
        %1242 = vmatpush1.msra.mxu0 0.0
        %1243 = vmatprep.subr.mxu0 0.0
        %1244 = vmatpush1.msra.mxu0 0.0
        %1245 = vmatprep.subr.mxu0 0.0
        %1246 = vmatpush1.msra.mxu0 0.0
        %1247 = vmatprep.subr.mxu0 0.0
        %1248 = vmatpush1.msra.mxu0 0.0
        %1249 = vmatprep.subr.mxu0 0.0
        %1250 = vmatpush1.msra.mxu0 0.0
        %1251 = vmatprep.subr.mxu0 0.0
        %1252 = vmatpush1.msra.mxu0 0.0
        %1253 = vmatprep.subr.mxu0 0.0
        %1254 = vmatpush1.msra.mxu0 0.0
        %1255 = vmatprep.subr.mxu0 0.0
        %1256 = vmatpush1.msra.mxu0 0.0
        %1257 = vmatprep.mubr.f32.mxu0 0.0
        %1258 = vmatmul.mubr.f32.gmra.mrb[0].mxu0 %v1191
        %v1259 = vpop.f32.mrb[0].mxu0
        %v1260 = vadd.f32 0.0, %v1259
        %v1261 = vpop.f32.mrb[0].mxu0
        %1262 = vdwg.mxu0
        %1264 = vrot.lane.b32.xlu0 %v1260, 16
        %v1265 = vpop.permute.xlu0 %1264
        %vm1267 = vcmask 195712
        %1268 = vst.msk [vmem:[%s488] sm:$0xff] %vm1267, %v1265
        %1269 = vrot.lane.b32.xlu0 %v751, 104
        %v1270 = vpop.permute.xlu0 %1269
        %1271 = vrot.lane.b32.xlu0 %v667, 104
        %v1272 = vpop.permute.xlu0 %1271
        %v1273 = vsel %vm759, %v1270, 0
        %v1275 = vsel %vm759, %v1272, 0
        %1277 = vmatprep.subr.mxu0 0.0
        %1278 = vmatpush1.xpose.msra.mxu0 %v1275
        %1279 = vmatprep.subr.mxu0 0.0
        %1280 = vmatpush1.xpose.msra.mxu0 0.0
        %1281 = vmatprep.subr.mxu0 0.0
        %1282 = vmatpush1.xpose.msra.mxu0 0.0
        %1283 = vmatprep.subr.mxu0 0.0
        %1284 = vmatpush1.xpose.msra.mxu0 0.0
        %1285 = vmatprep.subr.mxu0 0.0
        %1286 = vmatpush1.xpose.msra.mxu0 0.0
        %1287 = vmatprep.subr.mxu0 0.0
        %1288 = vmatpush1.xpose.msra.mxu0 0.0
        %1289 = vmatprep.subr.mxu0 0.0
        %1290 = vmatpush1.xpose.msra.mxu0 0.0
        %1291 = vmatprep.subr.mxu0 0.0
        %1292 = vmatpush1.xpose.msra.mxu0 0.0
        %1293 = vmatprep.subr.mxu0 0.0
        %1294 = vmatpush1.xpose.msra.mxu0 0.0
        %1295 = vmatprep.subr.mxu0 0.0
        %1296 = vmatpush1.xpose.msra.mxu0 0.0
        %1297 = vmatprep.subr.mxu0 0.0
        %1298 = vmatpush1.xpose.msra.mxu0 0.0
        %1299 = vmatprep.subr.mxu0 0.0
        %1300 = vmatpush1.xpose.msra.mxu0 0.0
        %1301 = vmatprep.subr.mxu0 0.0
        %1302 = vmatpush1.xpose.msra.mxu0 0.0
        %1303 = vmatprep.subr.mxu0 0.0
        %1304 = vmatpush1.xpose.msra.mxu0 0.0
        %1305 = vmatprep.subr.mxu0 0.0
        %1306 = vmatpush1.xpose.msra.mxu0 0.0
        %1307 = vmatprep.subr.mxu0 0.0
        %1308 = vmatpush1.xpose.msra.mxu0 0.0
        %1309 = vmatprep.subr.mxu0 0.0
        %1310 = vmatpush1.xpose.msra.mxu0 0.0
        %1311 = vmatprep.subr.mxu0 0.0
        %1312 = vmatpush1.xpose.msra.mxu0 0.0
        %1313 = vmatprep.subr.mxu0 0.0
        %1314 = vmatpush1.xpose.msra.mxu0 0.0
        %1315 = vmatprep.subr.mxu0 0.0
        %1316 = vmatpush1.xpose.msra.mxu0 0.0
        %1317 = vmatprep.subr.mxu0 0.0
        %1318 = vmatpush1.xpose.msra.mxu0 0.0
        %1319 = vmatprep.subr.mxu0 0.0
        %1320 = vmatpush1.xpose.msra.mxu0 0.0
        %1321 = vmatprep.subr.mxu0 0.0
        %1322 = vmatpush1.xpose.msra.mxu0 0.0
        %1323 = vmatprep.subr.mxu0 0.0
        %1324 = vmatpush1.xpose.msra.mxu0 0.0
        %1325 = vmatprep.subr.mxu0 0.0
        %1326 = vmatpush1.xpose.msra.mxu0 0.0
        %1327 = vmatprep.subr.mxu0 0.0
        %1328 = vmatpush1.xpose.msra.mxu0 0.0
        %1329 = vmatprep.subr.mxu0 0.0
        %1330 = vmatpush1.xpose.msra.mxu0 0.0
        %1331 = vmatprep.subr.mxu0 0.0
        %1332 = vmatpush1.xpose.msra.mxu0 0.0
        %1333 = vmatprep.subr.mxu0 0.0
        %1334 = vmatpush1.xpose.msra.mxu0 0.0
        %1335 = vmatprep.subr.mxu0 0.0
        %1336 = vmatpush1.xpose.msra.mxu0 0.0
        %1337 = vmatprep.subr.mxu0 0.0
        %1338 = vmatpush1.xpose.msra.mxu0 0.0
        %1339 = vmatprep.subr.mxu0 0.0
        %1340 = vmatpush1.xpose.msra.mxu0 0.0
        %1341 = vmatprep.mubr.f32.mxu0 0.0
        %1342 = vmatmul.mubr.f32.gmra.mrb[0].mxu0 %v1273
        %v1343 = vpop.f32.mrb[0].mxu0
        %v1344 = vadd.f32 %v757, %v1343
        %v1345 = vpop.f32.mrb[0].mxu0
        %1346 = vdwg.mxu0
        %s1347 = scalar_lea.vmem %s495, 24 [#allocation12]
        %1348 = vst.msk [vmem:[%s1347] sm:$0xff] %vm759, %v1344
        %v1349 = vsel %vm759, %v1344, -inf
        %1350 = vmax.xlane.f32.xlu0 %v1349
        %v1351 = vpop.xlane.xlu0 %1350
        %v1352 = vsub.f32 %v1344, %v1351
        %v1353 = vmul.f32 %v1352, 1.442695
        %v1354 = vpow.pop %v1353
        %v1355 = vsel %vm759, %v1354, 0.0
        %1356 = vadd.xlane.f32.xlu0 %v1355
        %v1357 = vpop.xlane.xlu0 %1356
        %v1358 = vrcp.pop %v1357
        %v1359 = vmul.f32 %v1354, %v1358
        %1360 = vrot.lane.b32.xlu0 %v748, 104
        %v1361 = vpop.permute.xlu0 %1360
        %v1364 = vsel %vm759, %v1359, 0
        %1366 = vmatprep.subr.mxu0 0.0
        %1367 = vmatpush1.msra.mxu0 %v1361
        %1368 = vmatprep.subr.mxu0 0.0
        %1369 = vmatpush1.msra.mxu0 0.0
        %1370 = vmatprep.subr.mxu0 0.0
        %1371 = vmatpush1.msra.mxu0 0.0
        %1372 = vmatprep.subr.mxu0 0.0
        %1373 = vmatpush1.msra.mxu0 0.0
        %1374 = vmatprep.subr.mxu0 0.0
        %1375 = vmatpush1.msra.mxu0 0.0
        %1376 = vmatprep.subr.mxu0 0.0
        %1377 = vmatpush1.msra.mxu0 0.0
        %1378 = vmatprep.subr.mxu0 0.0
        %1379 = vmatpush1.msra.mxu0 0.0
        %1380 = vmatprep.subr.mxu0 0.0
        %1381 = vmatpush1.msra.mxu0 0.0
        %1382 = vmatprep.subr.mxu0 0.0
        %1383 = vmatpush1.msra.mxu0 0.0
        %1384 = vmatprep.subr.mxu0 0.0
        %1385 = vmatpush1.msra.mxu0 0.0
        %1386 = vmatprep.subr.mxu0 0.0
        %1387 = vmatpush1.msra.mxu0 0.0
        %1388 = vmatprep.subr.mxu0 0.0
        %1389 = vmatpush1.msra.mxu0 0.0
        %1390 = vmatprep.subr.mxu0 0.0
        %1391 = vmatpush1.msra.mxu0 0.0
        %1392 = vmatprep.subr.mxu0 0.0
        %1393 = vmatpush1.msra.mxu0 0.0
        %1394 = vmatprep.subr.mxu0 0.0
        %1395 = vmatpush1.msra.mxu0 0.0
        %1396 = vmatprep.subr.mxu0 0.0
        %1397 = vmatpush1.msra.mxu0 0.0
        %1398 = vmatprep.subr.mxu0 0.0
        %1399 = vmatpush1.msra.mxu0 0.0
        %1400 = vmatprep.subr.mxu0 0.0
        %1401 = vmatpush1.msra.mxu0 0.0
        %1402 = vmatprep.subr.mxu0 0.0
        %1403 = vmatpush1.msra.mxu0 0.0
        %1404 = vmatprep.subr.mxu0 0.0
        %1405 = vmatpush1.msra.mxu0 0.0
        %1406 = vmatprep.subr.mxu0 0.0
        %1407 = vmatpush1.msra.mxu0 0.0
        %1408 = vmatprep.subr.mxu0 0.0
        %1409 = vmatpush1.msra.mxu0 0.0
        %1410 = vmatprep.subr.mxu0 0.0
        %1411 = vmatpush1.msra.mxu0 0.0
        %1412 = vmatprep.subr.mxu0 0.0
        %1413 = vmatpush1.msra.mxu0 0.0
        %1414 = vmatprep.subr.mxu0 0.0
        %1415 = vmatpush1.msra.mxu0 0.0
        %1416 = vmatprep.subr.mxu0 0.0
        %1417 = vmatpush1.msra.mxu0 0.0
        %1418 = vmatprep.subr.mxu0 0.0
        %1419 = vmatpush1.msra.mxu0 0.0
        %1420 = vmatprep.subr.mxu0 0.0
        %1421 = vmatpush1.msra.mxu0 0.0
        %1422 = vmatprep.subr.mxu0 0.0
        %1423 = vmatpush1.msra.mxu0 0.0
        %1424 = vmatprep.subr.mxu0 0.0
        %1425 = vmatpush1.msra.mxu0 0.0
        %1426 = vmatprep.subr.mxu0 0.0
        %1427 = vmatpush1.msra.mxu0 0.0
        %1428 = vmatprep.subr.mxu0 0.0
        %1429 = vmatpush1.msra.mxu0 0.0
        %1430 = vmatprep.mubr.f32.mxu0 0.0
        %1431 = vmatmul.mubr.f32.gmra.mrb[0].mxu0 %v1364
        %v1432 = vpop.f32.mrb[0].mxu0
        %v1433 = vadd.f32 0.0, %v1432
        %v1434 = vpop.f32.mrb[0].mxu0
        %1435 = vdwg.mxu0
        %1437 = vrot.lane.b32.xlu0 %v1433, 24
        %v1438 = vpop.permute.xlu0 %1437
        %vm1440 = vcmask 261312
        %1441 = vst.msk [vmem:[%s488] sm:$0xff] %vm1440, %v1438
        %s1442 = sand.u32 %s263, 1
        %s1443 = scalar_lea.sflag [#allocation4], %s1442
        %s1444 = sand.u32 %s263, 1
        %s1445 = smul.addr %s1444, 8
        %s1446 = scalar_lea.vmem [#allocation11], %s1445
        %s1447 = sand.u32 %s291, 1
        %s1448 = scalar_lea.sflag [#allocation13], %s1447
        %s1449 = sand.u32 %s291, 1
        %s1450 = smul.addr %s1449, 32
        %s1451 = scalar_lea.vmem [#allocation12], %s1450
        // Predicated region
        $region77: #{tpu_custom_call.1} parent=55 // pred_check
          %p1452 = pneg %p273
        $region78: #{tpu_custom_call.1} parent=55 // pred_check_branch
          %1454 = sbr.rel (%p1452) target = $region80
        $region79: #{tpu_custom_call.1} parent=55 // pred_region
          %s1456 = ssub.s32 128, 128
          %1457 = vsyncadd %s1443, %s1456
          %s1458 = sadd.s32 %s40, %s39
          %s1459 = smul.addr %s1458, 128
          %s1460 = scalar_lea.hbm %s9, %s1459
          %s1462 = sshll.u32 %s1446, 4
          %s1463 = int_to_ptr.vmem [resolvable:$true] %s1462
          %1465 = dma.vmem_to_hbm [thread:$0]  %s1463, 128, %s1460, %s1443
        $region80: #{tpu_custom_call.1} parent=55 // pred_fallthru
          _
        // Predicated region
        $region81: #{tpu_custom_call.1} parent=55 // pred_check
          %p1466 = pneg %p301
        $region82: #{tpu_custom_call.1} parent=55 // pred_check_branch
          %1468 = sbr.rel (%p1466) target = $region84
        $region83: #{tpu_custom_call.1} parent=55 // pred_region
          %s1470 = ssub.s32 512, 512
          %1471 = vsyncadd %s1448, %s1470
          %s1472 = smul.addr %s39, 4
          %s1473 = sadd.s32 %s40, %s1472
          %s1474 = smul.addr %s1473, 128
          %s1475 = scalar_lea.hbm %s10, %s1474
          %s1476 = sshll.u32 %s1451, 4
          %s1477 = int_to_ptr.vmem [resolvable:$true] %s1476
          %1482 = dma.vmem_to_hbm [thread:$0]  %s1477, 512, %s1475, %s1448, 128, 128, 8
        $region84: #{tpu_custom_call.1} parent=55 // pred_fallthru
          _
      $region56: #{tpu_custom_call.1} parent=5 // pred_fallthru
        _
      %p1483 = scmp.le.s32.totalorder 2, %s30
      // Predicated region
      $region85: #{tpu_custom_call.1} parent=5 // pred_check
        %p1484 = pneg %p1483
      $region86: #{tpu_custom_call.1} parent=5 // pred_check_branch
        %1486 = sbr.rel (%p1484) target = $region88
      $region87: #{tpu_custom_call.1} parent=5 // pred_region
        %s1487 = ssub.s32 %s30, 2
        // Predicated region
        $region89: #{tpu_custom_call.1} parent=87 // pred_check
          %p1488 = pneg %p279
        $region90: #{tpu_custom_call.1} parent=87 // pred_check_branch
          %1490 = sbr.rel (%p1488) target = $region92
        $region91: #{tpu_custom_call.1} parent=87 // pred_region
          %s1491 = sand.u32 %s264, 1
          %s1492 = scalar_lea.sflag [#allocation4], %s1491
          %s1493 = sand.u32 %s264, 1
          %s1494 = smul.addr %s1493, 8
          %s1495 = scalar_lea.vmem [#allocation11], %s1494
          %1496 = dma.done %s1492, 128
        $region92: #{tpu_custom_call.1} parent=87 // pred_fallthru
          _
        // Predicated region
        $region93: #{tpu_custom_call.1} parent=87 // pred_check
          %p1497 = pneg %p307
        $region94: #{tpu_custom_call.1} parent=87 // pred_check_branch
          %1499 = sbr.rel (%p1497) target = $region96
        $region95: #{tpu_custom_call.1} parent=87 // pred_region
          %s1500 = sand.u32 %s292, 1
          %s1501 = scalar_lea.sflag [#allocation13], %s1500
          %s1502 = sand.u32 %s292, 1
          %s1503 = smul.addr %s1502, 32
          %s1504 = scalar_lea.vmem [#allocation12], %s1503
          %1505 = dma.done %s1501, 512
        $region96: #{tpu_custom_call.1} parent=87 // pred_fallthru
          _
      $region88: #{tpu_custom_call.1} parent=5 // pred_fallthru
        _
    $region6: #{tpu_custom_call.1} parent=1 // loop_footer
      %s34 = sadd.s32 1, %s30
    $region7: #{tpu_custom_call.1} parent=1 // loop_footer_branch
      %29 = sbr.rel target = $region3
    $region8: #{tpu_custom_call.1} parent=1 // loop_exit
      _
    %1506 = vsyncpa [#allocation3], 1
    %s1507 = scalar_lea.sflag [#allocation3], 1
    %1508 = vsyncpa %s1507, 1
    %1509 = vsyncpa [#allocation6], 1
    %s1510 = scalar_lea.sflag [#allocation6], 1
    %1511 = vsyncpa %s1510, 1
    %1512 = vsyncpa [#allocation9], 1
    %1513 = vsyncpa [#allocation4], 1
    %s1514 = scalar_lea.sflag [#allocation4], 1
    %1515 = vsyncpa %s1514, 1
    %1516 = vsyncpa [#allocation13], 1
    %s1517 = scalar_lea.sflag [#allocation13], 1
    %1518 = vsyncpa %s1517, 1

</llo_original>
